<compile_context>
chip_gen: v7x
topology: tpu7x:2x2x1
jax: 0.10.0
libtpu: 0.0.40
codegen_flags: <defaults>
</compile_context>

<pallas_src>
import functools
import math

import jax
import jax.numpy as jnp
from jax.experimental import pallas as pl
from jax.experimental.pallas import tpu as pltpu


# --------------------------------------------------------------------------
# Pass 1: 3x3 conv (stride 1, zero pad folded in-kernel) + bias, plus
#         per-channel column sums of the pre-bias activation and its square
#         (for the BatchNorm batch statistics).
# --------------------------------------------------------------------------
def _conv_stats_kernel(w_ref, b_ref, x_ref, y_ref, ps_ref, *, cin, cout, H, W, TH):
    # w_ref : SMEM (cout*cin*9,) f32, flattened OIHW weights
    # b_ref : SMEM (cout,)       f32, conv bias
    # x_ref : VMEM (1, cin, H, W)     one (unpadded) image per grid step
    # y_ref : VMEM (1, cout, H, W)    conv output (lane axis = W)
    # ps_ref: VMEM (1, 2*cout, W)     column sums: rows [0:cout]   = sum(a)
    #                                 rows [cout:2*cout] = sum(a*a), a = y - bias
    f32 = jnp.float32
    ssum = [jnp.zeros((1, W), f32) for _ in range(cout)]
    ssq = [jnp.zeros((1, W), f32) for _ in range(cout)]

    use_roll = (W % 128 == 0)  # lane-aligned width -> XLU rotates

    r0 = 0
    while r0 < H:                       # static (trace-time) row-tile loop
        th = min(TH, H - r0)

        if use_roll:
            lane = jax.lax.broadcasted_iota(jnp.int32, (th, W), 1)
            not_first_col = lane >= 1
            not_last_col = lane <= W - 2

        # register-resident per-channel accumulators for this row tile
        acc = [jnp.zeros((th, W), f32) for _ in range(cout)]

        for ci in range(cin):
            for di in range(3):
                # input rows feeding output rows [r0, r0+th) for this tap row
                lo = r0 + di - 1
                hi = lo + th
                vlo = max(lo, 0)
                vhi = min(hi, H)
                base = x_ref[0, ci, vlo:vhi, :]
                if vlo > lo:            # top zero-pad row (first tile, di=0)
                    base = jnp.concatenate(
                        [jnp.zeros((vlo - lo, W), f32), base], axis=0)
                if hi > vhi:            # bottom zero-pad row (last tile, di=2)
                    base = jnp.concatenate(
                        [base, jnp.zeros((hi - vhi, W), f32)], axis=0)

                # the three column taps reuse the same loaded window
                if use_roll:
                    wm1 = jnp.where(not_first_col,
                                    pltpu.roll(base, 1, 1), 0.0)       # x[:, j-1]
                    wp1 = jnp.where(not_last_col,
                                    pltpu.roll(base, W - 1, 1), 0.0)   # x[:, j+1]
                else:
                    zc = jnp.zeros((th, 1), f32)
                    wm1 = jnp.concatenate([zc, base[:, : W - 1]], axis=1)
                    wp1 = jnp.concatenate([base[:, 1:], zc], axis=1)
                wins = (wm1, base, wp1)

                for dj in range(3):
                    win = wins[dj]
                    for co in range(cout):
                        wv = w_ref[((co * cin + ci) * 3 + di) * 3 + dj]
                        acc[co] = acc[co] + win * wv

        for co in range(cout):
            y_ref[0, co, r0:r0 + th, :] = acc[co] + b_ref[co]
            ssum[co] = ssum[co] + jnp.sum(acc[co], axis=0, keepdims=True)
            ssq[co] = ssq[co] + jnp.sum(acc[co] * acc[co], axis=0, keepdims=True)

        r0 += th

    for co in range(cout):
        ps_ref[0, co:co + 1, :] = ssum[co]
        ps_ref[0, cout + co:cout + co + 1, :] = ssq[co]


# --------------------------------------------------------------------------
# Forward wrapper (matches get_disp.forward semantics; NCHW in / NCHW out)
# --------------------------------------------------------------------------
def get_disp_forward(params, x):
    w = params["w"]          # (cout, cin, 3, 3)  OIHW, like PyTorch
    b = params["b"]          # (cout,)
    gamma = params["gamma"]  # (cout,)
    beta = params["beta"]    # (cout,)
    n, cin, H, W = x.shape
    cout = w.shape[0]
    eps = 1e-5

    wf = w.reshape(-1).astype(jnp.float32)
    bf = b.astype(jnp.float32)
    xf = x.astype(jnp.float32)

    y, psums = pl.pallas_call(
        functools.partial(_conv_stats_kernel,
                          cin=cin, cout=cout, H=H, W=W, TH=8),
        out_shape=(
            jax.ShapeDtypeStruct((n, cout, H, W), jnp.float32),
            jax.ShapeDtypeStruct((n, 2 * cout, W), jnp.float32),
        ),
        grid_spec=pltpu.PrefetchScalarGridSpec(
            num_scalar_prefetch=0,
            grid=(n,),
            in_specs=[
                pl.BlockSpec(memory_space=pltpu.MemorySpace.SMEM),   # weights
                pl.BlockSpec(memory_space=pltpu.MemorySpace.SMEM),   # bias
                pl.BlockSpec((1, cin, H, W), lambda i: (i, 0, 0, 0)),
            ],
            out_specs=(
                pl.BlockSpec((1, cout, H, W), lambda i: (i, 0, 0, 0)),
                pl.BlockSpec((1, 2 * cout, W), lambda i: (i, 0, 0)),
            ),
        ),
        compiler_params=pltpu.CompilerParams(dimension_semantics=("parallel",)),
    )(wf, bf, xf)

    # BatchNorm training-mode batch statistics from the bias-centered column
    # sums (a = conv - bias): mean = E[a] + bias, var = E[a^2] - E[a]^2.
    cnt = float(n * H * W)
    s = jnp.sum(psums, axis=(0, 2))                      # (2*cout,)
    mc = s[:cout] / cnt
    var = jnp.maximum(s[cout:] / cnt - mc * mc, 0.0)
    mean = mc + bf
    scale = gamma * jax.lax.rsqrt(var + eps)
    shift = beta - mean * scale

    # Pure elementwise epilogue -> single fused XLA kernel (per perf review).
    return 0.3 * jax.nn.sigmoid(
        y * scale[None, :, None, None] + shift[None, :, None, None])


# --------------------------------------------------------------------------
# Deterministic parameters mimicking PyTorch defaults
# (Conv2d: U(-1/sqrt(fan_in), 1/sqrt(fan_in)) weight & bias; BN: gamma=1, beta=0)
# --------------------------------------------------------------------------
def build_params(key, in_layers, cout=2, k=3):
    kw, kb = jax.random.split(key)
    fan_in = in_layers * k * k
    bound = 1.0 / math.sqrt(fan_in)
    w = jax.random.uniform(kw, (cout, in_layers, k, k), jnp.float32, -bound, bound)
    b = jax.random.uniform(kb, (cout,), jnp.float32, -bound, bound)
    return {
        "w": w,
        "b": b,
        "gamma": jnp.ones((cout,), jnp.float32),
        "beta": jnp.zeros((cout,), jnp.float32),
    }


if __name__ == "__main__":
    key = jax.random.PRNGKey(0)
    pkey, xkey = jax.random.split(key)

    N, Cin, H, W = 2, 4, 16, 16
    Cout = 2
    params = build_params(pkey, in_layers=Cin, cout=Cout)
    x = jax.random.normal(xkey, (N, Cin, H, W), jnp.float32)

    out = jax.jit(get_disp_forward)(params, x)
    out = jax.block_until_ready(out)

    # Pure-JAX reference (same math as the PyTorch module, f32 precision).
    x1 = jax.lax.conv_general_dilated(
        x, params["w"], (1, 1), ((1, 1), (1, 1)),
        dimension_numbers=("NCHW", "OIHW", "NCHW"),
        precision=jax.lax.Precision.HIGHEST,
    ) + params["b"].reshape(1, Cout, 1, 1)
    mu = jnp.mean(x1, axis=(0, 2, 3), keepdims=True)
    var = jnp.var(x1, axis=(0, 2, 3), keepdims=True)
    z = ((x1 - mu) / jnp.sqrt(var + 1e-5)
         * params["gamma"].reshape(1, Cout, 1, 1)
         + params["beta"].reshape(1, Cout, 1, 1))
    ref = 0.3 / (1.0 + jnp.exp(-z))

    assert out.shape == (N, Cout, H, W)
    assert bool(jnp.all(jnp.isfinite(out)))
    assert bool(jnp.all((out >= 0.0) & (out <= 0.3)))
    err = float(jnp.max(jnp.abs(out - ref)))
    assert bool(jnp.allclose(out, ref, atol=1e-4, rtol=1e-3)), f"max abs err {err}"
    print("KERNEL_OK")
</pallas_src>

<mosaic_0001>
module attributes {stable_mosaic.version = 11 : i64} {
  func.func @_conv_stats_kernel(%arg0: i32, %arg1: memref<72xf32, #tpu.memory_space<smem>>, %arg2: memref<2xf32, #tpu.memory_space<smem>>, %arg3: memref<1x4x16x16xf32, #tpu.memory_space<vmem>>, %arg4: memref<1x2x16x16xf32, #tpu.memory_space<vmem>>, %arg5: memref<1x4x16xf32, #tpu.memory_space<vmem>>) attributes {dimension_semantics = [#tpu.dimension_semantics<parallel>], iteration_bounds = array<i64: 2>, scalar_prefetch = 0 : i64, scratch_operands = 0 : i64, tpu.core_type = #tpu.core_type<tc>, window_params = [{transform_indices = @transform_0, window_bounds = array<i64: 72>}, {transform_indices = @transform_1, window_bounds = array<i64: 2>}, {transform_indices = @transform_2, window_bounds = array<i64: 1, 4, 16, 16>}, {transform_indices = @transform_3, window_bounds = array<i64: 1, 2, 16, 16>}, {transform_indices = @transform_4, window_bounds = array<i64: 1, 4, 16>}]} {
    %cst = arith.constant 0.000000e+00 : f32
    %0 = vector.broadcast %cst : f32 to vector<1x16xf32>
    %cst_0 = arith.constant 0.000000e+00 : f32
    %1 = vector.broadcast %cst_0 : f32 to vector<1x16xf32>
    %cst_1 = arith.constant 0.000000e+00 : f32
    %2 = vector.broadcast %cst_1 : f32 to vector<1x16xf32>
    %cst_2 = arith.constant 0.000000e+00 : f32
    %3 = vector.broadcast %cst_2 : f32 to vector<1x16xf32>
    %cst_3 = arith.constant 0.000000e+00 : f32
    %4 = vector.broadcast %cst_3 : f32 to vector<8x16xf32>
    %cst_4 = arith.constant 0.000000e+00 : f32
    %5 = vector.broadcast %cst_4 : f32 to vector<8x16xf32>
    %c0 = arith.constant 0 : index
    %c0_5 = arith.constant 0 : index
    %c0_6 = arith.constant 0 : index
    %c0_7 = arith.constant 0 : index
    %6 = vector.load %arg3[%c0, %c0_5, %c0_6, %c0_7] : memref<1x4x16x16xf32, #tpu.memory_space<vmem>>, vector<1x1x7x16xf32>
    %7 = vector.shape_cast %6 : vector<1x1x7x16xf32> to vector<7x16xf32>
    %cst_8 = arith.constant 0.000000e+00 : f32
    %8 = vector.broadcast %cst_8 : f32 to vector<1x16xf32>
    %9 = tpu.concatenate %8, %7 in 0 : vector<1x16xf32>, vector<7x16xf32> -> vector<8x16xf32>
    %cst_9 = arith.constant 0.000000e+00 : f32
    %10 = vector.broadcast %cst_9 : f32 to vector<8x1xf32>
    %11 = vector.extract_strided_slice %9 {offsets = [0, 0], sizes = [8, 15], strides = [1, 1]} : vector<8x16xf32> to vector<8x15xf32>
    %12 = tpu.concatenate %10, %11 in 1 : vector<8x1xf32>, vector<8x15xf32> -> vector<8x16xf32>
    %13 = vector.extract_strided_slice %9 {offsets = [0, 1], sizes = [8, 15], strides = [1, 1]} : vector<8x16xf32> to vector<8x15xf32>
    %14 = tpu.concatenate %13, %10 in 1 : vector<8x15xf32>, vector<8x1xf32> -> vector<8x16xf32>
    %c0_10 = arith.constant 0 : index
    %15 = memref.load %arg1[%c0_10] : memref<72xf32, #tpu.memory_space<smem>>
    %16 = vector.broadcast %15 : f32 to vector<8x16xf32>
    %17 = arith.mulf %12, %16 : vector<8x16xf32>
    %18 = arith.addf %4, %17 : vector<8x16xf32>
    %c36 = arith.constant 36 : index
    %19 = memref.load %arg1[%c36] : memref<72xf32, #tpu.memory_space<smem>>
    %20 = vector.broadcast %19 : f32 to vector<8x16xf32>
    %21 = arith.mulf %12, %20 : vector<8x16xf32>
    %22 = arith.addf %5, %21 : vector<8x16xf32>
    %c1 = arith.constant 1 : index
    %23 = memref.load %arg1[%c1] : memref<72xf32, #tpu.memory_space<smem>>
    %24 = vector.broadcast %23 : f32 to vector<8x16xf32>
    %25 = arith.mulf %9, %24 : vector<8x16xf32>
    %26 = arith.addf %18, %25 : vector<8x16xf32>
    %c37 = arith.constant 37 : index
    %27 = memref.load %arg1[%c37] : memref<72xf32, #tpu.memory_space<smem>>
    %28 = vector.broadcast %27 : f32 to vector<8x16xf32>
    %29 = arith.mulf %9, %28 : vector<8x16xf32>
    %30 = arith.addf %22, %29 : vector<8x16xf32>
    %c2 = arith.constant 2 : index
    %31 = memref.load %arg1[%c2] : memref<72xf32, #tpu.memory_space<smem>>
    %32 = vector.broadcast %31 : f32 to vector<8x16xf32>
    %33 = arith.mulf %14, %32 : vector<8x16xf32>
    %34 = arith.addf %26, %33 : vector<8x16xf32>
    %c38 = arith.constant 38 : index
    %35 = memref.load %arg1[%c38] : memref<72xf32, #tpu.memory_space<smem>>
    %36 = vector.broadcast %35 : f32 to vector<8x16xf32>
    %37 = arith.mulf %14, %36 : vector<8x16xf32>
    %38 = arith.addf %30, %37 : vector<8x16xf32>
    %c0_11 = arith.constant 0 : index
    %c0_12 = arith.constant 0 : index
    %c0_13 = arith.constant 0 : index
    %c0_14 = arith.constant 0 : index
    %39 = vector.load %arg3[%c0_11, %c0_12, %c0_13, %c0_14] : memref<1x4x16x16xf32, #tpu.memory_space<vmem>>, vector<1x1x8x16xf32>
    %40 = vector.shape_cast %39 : vector<1x1x8x16xf32> to vector<8x16xf32>
    %cst_15 = arith.constant 0.000000e+00 : f32
    %41 = vector.broadcast %cst_15 : f32 to vector<8x1xf32>
    %42 = vector.extract_strided_slice %40 {offsets = [0, 0], sizes = [8, 15], strides = [1, 1]} : vector<8x16xf32> to vector<8x15xf32>
    %43 = tpu.concatenate %41, %42 in 1 : vector<8x1xf32>, vector<8x15xf32> -> vector<8x16xf32>
    %44 = vector.extract_strided_slice %40 {offsets = [0, 1], sizes = [8, 15], strides = [1, 1]} : vector<8x16xf32> to vector<8x15xf32>
    %45 = tpu.concatenate %44, %41 in 1 : vector<8x15xf32>, vector<8x1xf32> -> vector<8x16xf32>
    %c3 = arith.constant 3 : index
    %46 = memref.load %arg1[%c3] : memref<72xf32, #tpu.memory_space<smem>>
    %47 = vector.broadcast %46 : f32 to vector<8x16xf32>
    %48 = arith.mulf %43, %47 : vector<8x16xf32>
    %49 = arith.addf %34, %48 : vector<8x16xf32>
    %c39 = arith.constant 39 : index
    %50 = memref.load %arg1[%c39] : memref<72xf32, #tpu.memory_space<smem>>
    %51 = vector.broadcast %50 : f32 to vector<8x16xf32>
    %52 = arith.mulf %43, %51 : vector<8x16xf32>
    %53 = arith.addf %38, %52 : vector<8x16xf32>
    %c4 = arith.constant 4 : index
    %54 = memref.load %arg1[%c4] : memref<72xf32, #tpu.memory_space<smem>>
    %55 = vector.broadcast %54 : f32 to vector<8x16xf32>
    %56 = arith.mulf %40, %55 : vector<8x16xf32>
    %57 = arith.addf %49, %56 : vector<8x16xf32>
    %c40 = arith.constant 40 : index
    %58 = memref.load %arg1[%c40] : memref<72xf32, #tpu.memory_space<smem>>
    %59 = vector.broadcast %58 : f32 to vector<8x16xf32>
    %60 = arith.mulf %40, %59 : vector<8x16xf32>
    %61 = arith.addf %53, %60 : vector<8x16xf32>
    %c5 = arith.constant 5 : index
    %62 = memref.load %arg1[%c5] : memref<72xf32, #tpu.memory_space<smem>>
    %63 = vector.broadcast %62 : f32 to vector<8x16xf32>
    %64 = arith.mulf %45, %63 : vector<8x16xf32>
    %65 = arith.addf %57, %64 : vector<8x16xf32>
    %c41 = arith.constant 41 : index
    %66 = memref.load %arg1[%c41] : memref<72xf32, #tpu.memory_space<smem>>
    %67 = vector.broadcast %66 : f32 to vector<8x16xf32>
    %68 = arith.mulf %45, %67 : vector<8x16xf32>
    %69 = arith.addf %61, %68 : vector<8x16xf32>
    %c0_16 = arith.constant 0 : index
    %c0_17 = arith.constant 0 : index
    %c1_18 = arith.constant 1 : index
    %c0_19 = arith.constant 0 : index
    %70 = vector.load %arg3[%c0_16, %c0_17, %c1_18, %c0_19] : memref<1x4x16x16xf32, #tpu.memory_space<vmem>>, vector<1x1x8x16xf32>
    %71 = vector.shape_cast %70 : vector<1x1x8x16xf32> to vector<8x16xf32>
    %cst_20 = arith.constant 0.000000e+00 : f32
    %72 = vector.broadcast %cst_20 : f32 to vector<8x1xf32>
    %73 = vector.extract_strided_slice %71 {offsets = [0, 0], sizes = [8, 15], strides = [1, 1]} : vector<8x16xf32> to vector<8x15xf32>
    %74 = tpu.concatenate %72, %73 in 1 : vector<8x1xf32>, vector<8x15xf32> -> vector<8x16xf32>
    %75 = vector.extract_strided_slice %71 {offsets = [0, 1], sizes = [8, 15], strides = [1, 1]} : vector<8x16xf32> to vector<8x15xf32>
    %76 = tpu.concatenate %75, %72 in 1 : vector<8x15xf32>, vector<8x1xf32> -> vector<8x16xf32>
    %c6 = arith.constant 6 : index
    %77 = memref.load %arg1[%c6] : memref<72xf32, #tpu.memory_space<smem>>
    %78 = vector.broadcast %77 : f32 to vector<8x16xf32>
    %79 = arith.mulf %74, %78 : vector<8x16xf32>
    %80 = arith.addf %65, %79 : vector<8x16xf32>
    %c42 = arith.constant 42 : index
    %81 = memref.load %arg1[%c42] : memref<72xf32, #tpu.memory_space<smem>>
    %82 = vector.broadcast %81 : f32 to vector<8x16xf32>
    %83 = arith.mulf %74, %82 : vector<8x16xf32>
    %84 = arith.addf %69, %83 : vector<8x16xf32>
    %c7 = arith.constant 7 : index
    %85 = memref.load %arg1[%c7] : memref<72xf32, #tpu.memory_space<smem>>
    %86 = vector.broadcast %85 : f32 to vector<8x16xf32>
    %87 = arith.mulf %71, %86 : vector<8x16xf32>
    %88 = arith.addf %80, %87 : vector<8x16xf32>
    %c43 = arith.constant 43 : index
    %89 = memref.load %arg1[%c43] : memref<72xf32, #tpu.memory_space<smem>>
    %90 = vector.broadcast %89 : f32 to vector<8x16xf32>
    %91 = arith.mulf %71, %90 : vector<8x16xf32>
    %92 = arith.addf %84, %91 : vector<8x16xf32>
    %c8 = arith.constant 8 : index
    %93 = memref.load %arg1[%c8] : memref<72xf32, #tpu.memory_space<smem>>
    %94 = vector.broadcast %93 : f32 to vector<8x16xf32>
    %95 = arith.mulf %76, %94 : vector<8x16xf32>
    %96 = arith.addf %88, %95 : vector<8x16xf32>
    %c44 = arith.constant 44 : index
    %97 = memref.load %arg1[%c44] : memref<72xf32, #tpu.memory_space<smem>>
    %98 = vector.broadcast %97 : f32 to vector<8x16xf32>
    %99 = arith.mulf %76, %98 : vector<8x16xf32>
    %100 = arith.addf %92, %99 : vector<8x16xf32>
    %c0_21 = arith.constant 0 : index
    %c1_22 = arith.constant 1 : index
    %c0_23 = arith.constant 0 : index
    %c0_24 = arith.constant 0 : index
    %101 = vector.load %arg3[%c0_21, %c1_22, %c0_23, %c0_24] : memref<1x4x16x16xf32, #tpu.memory_space<vmem>>, vector<1x1x7x16xf32>
    %102 = vector.shape_cast %101 : vector<1x1x7x16xf32> to vector<7x16xf32>
    %cst_25 = arith.constant 0.000000e+00 : f32
    %103 = vector.broadcast %cst_25 : f32 to vector<1x16xf32>
    %104 = tpu.concatenate %103, %102 in 0 : vector<1x16xf32>, vector<7x16xf32> -> vector<8x16xf32>
    %cst_26 = arith.constant 0.000000e+00 : f32
    %105 = vector.broadcast %cst_26 : f32 to vector<8x1xf32>
    %106 = vector.extract_strided_slice %104 {offsets = [0, 0], sizes = [8, 15], strides = [1, 1]} : vector<8x16xf32> to vector<8x15xf32>
    %107 = tpu.concatenate %105, %106 in 1 : vector<8x1xf32>, vector<8x15xf32> -> vector<8x16xf32>
    %108 = vector.extract_strided_slice %104 {offsets = [0, 1], sizes = [8, 15], strides = [1, 1]} : vector<8x16xf32> to vector<8x15xf32>
    %109 = tpu.concatenate %108, %105 in 1 : vector<8x15xf32>, vector<8x1xf32> -> vector<8x16xf32>
    %c9 = arith.constant 9 : index
    %110 = memref.load %arg1[%c9] : memref<72xf32, #tpu.memory_space<smem>>
    %111 = vector.broadcast %110 : f32 to vector<8x16xf32>
    %112 = arith.mulf %107, %111 : vector<8x16xf32>
    %113 = arith.addf %96, %112 : vector<8x16xf32>
    %c45 = arith.constant 45 : index
    %114 = memref.load %arg1[%c45] : memref<72xf32, #tpu.memory_space<smem>>
    %115 = vector.broadcast %114 : f32 to vector<8x16xf32>
    %116 = arith.mulf %107, %115 : vector<8x16xf32>
    %117 = arith.addf %100, %116 : vector<8x16xf32>
    %c10 = arith.constant 10 : index
    %118 = memref.load %arg1[%c10] : memref<72xf32, #tpu.memory_space<smem>>
    %119 = vector.broadcast %118 : f32 to vector<8x16xf32>
    %120 = arith.mulf %104, %119 : vector<8x16xf32>
    %121 = arith.addf %113, %120 : vector<8x16xf32>
    %c46 = arith.constant 46 : index
    %122 = memref.load %arg1[%c46] : memref<72xf32, #tpu.memory_space<smem>>
    %123 = vector.broadcast %122 : f32 to vector<8x16xf32>
    %124 = arith.mulf %104, %123 : vector<8x16xf32>
    %125 = arith.addf %117, %124 : vector<8x16xf32>
    %c11 = arith.constant 11 : index
    %126 = memref.load %arg1[%c11] : memref<72xf32, #tpu.memory_space<smem>>
    %127 = vector.broadcast %126 : f32 to vector<8x16xf32>
    %128 = arith.mulf %109, %127 : vector<8x16xf32>
    %129 = arith.addf %121, %128 : vector<8x16xf32>
    %c47 = arith.constant 47 : index
    %130 = memref.load %arg1[%c47] : memref<72xf32, #tpu.memory_space<smem>>
    %131 = vector.broadcast %130 : f32 to vector<8x16xf32>
    %132 = arith.mulf %109, %131 : vector<8x16xf32>
    %133 = arith.addf %125, %132 : vector<8x16xf32>
    %c0_27 = arith.constant 0 : index
    %c1_28 = arith.constant 1 : index
    %c0_29 = arith.constant 0 : index
    %c0_30 = arith.constant 0 : index
    %134 = vector.load %arg3[%c0_27, %c1_28, %c0_29, %c0_30] : memref<1x4x16x16xf32, #tpu.memory_space<vmem>>, vector<1x1x8x16xf32>
    %135 = vector.shape_cast %134 : vector<1x1x8x16xf32> to vector<8x16xf32>
    %cst_31 = arith.constant 0.000000e+00 : f32
    %136 = vector.broadcast %cst_31 : f32 to vector<8x1xf32>
    %137 = vector.extract_strided_slice %135 {offsets = [0, 0], sizes = [8, 15], strides = [1, 1]} : vector<8x16xf32> to vector<8x15xf32>
    %138 = tpu.concatenate %136, %137 in 1 : vector<8x1xf32>, vector<8x15xf32> -> vector<8x16xf32>
    %139 = vector.extract_strided_slice %135 {offsets = [0, 1], sizes = [8, 15], strides = [1, 1]} : vector<8x16xf32> to vector<8x15xf32>
    %140 = tpu.concatenate %139, %136 in 1 : vector<8x15xf32>, vector<8x1xf32> -> vector<8x16xf32>
    %c12 = arith.constant 12 : index
    %141 = memref.load %arg1[%c12] : memref<72xf32, #tpu.memory_space<smem>>
    %142 = vector.broadcast %141 : f32 to vector<8x16xf32>
    %143 = arith.mulf %138, %142 : vector<8x16xf32>
    %144 = arith.addf %129, %143 : vector<8x16xf32>
    %c48 = arith.constant 48 : index
    %145 = memref.load %arg1[%c48] : memref<72xf32, #tpu.memory_space<smem>>
    %146 = vector.broadcast %145 : f32 to vector<8x16xf32>
    %147 = arith.mulf %138, %146 : vector<8x16xf32>
    %148 = arith.addf %133, %147 : vector<8x16xf32>
    %c13 = arith.constant 13 : index
    %149 = memref.load %arg1[%c13] : memref<72xf32, #tpu.memory_space<smem>>
    %150 = vector.broadcast %149 : f32 to vector<8x16xf32>
    %151 = arith.mulf %135, %150 : vector<8x16xf32>
    %152 = arith.addf %144, %151 : vector<8x16xf32>
    %c49 = arith.constant 49 : index
    %153 = memref.load %arg1[%c49] : memref<72xf32, #tpu.memory_space<smem>>
    %154 = vector.broadcast %153 : f32 to vector<8x16xf32>
    %155 = arith.mulf %135, %154 : vector<8x16xf32>
    %156 = arith.addf %148, %155 : vector<8x16xf32>
    %c14 = arith.constant 14 : index
    %157 = memref.load %arg1[%c14] : memref<72xf32, #tpu.memory_space<smem>>
    %158 = vector.broadcast %157 : f32 to vector<8x16xf32>
    %159 = arith.mulf %140, %158 : vector<8x16xf32>
    %160 = arith.addf %152, %159 : vector<8x16xf32>
    %c50 = arith.constant 50 : index
    %161 = memref.load %arg1[%c50] : memref<72xf32, #tpu.memory_space<smem>>
    %162 = vector.broadcast %161 : f32 to vector<8x16xf32>
    %163 = arith.mulf %140, %162 : vector<8x16xf32>
    %164 = arith.addf %156, %163 : vector<8x16xf32>
    %c0_32 = arith.constant 0 : index
    %c1_33 = arith.constant 1 : index
    %c1_34 = arith.constant 1 : index
    %c0_35 = arith.constant 0 : index
    %165 = vector.load %arg3[%c0_32, %c1_33, %c1_34, %c0_35] : memref<1x4x16x16xf32, #tpu.memory_space<vmem>>, vector<1x1x8x16xf32>
    %166 = vector.shape_cast %165 : vector<1x1x8x16xf32> to vector<8x16xf32>
    %cst_36 = arith.constant 0.000000e+00 : f32
    %167 = vector.broadcast %cst_36 : f32 to vector<8x1xf32>
    %168 = vector.extract_strided_slice %166 {offsets = [0, 0], sizes = [8, 15], strides = [1, 1]} : vector<8x16xf32> to vector<8x15xf32>
    %169 = tpu.concatenate %167, %168 in 1 : vector<8x1xf32>, vector<8x15xf32> -> vector<8x16xf32>
    %170 = vector.extract_strided_slice %166 {offsets = [0, 1], sizes = [8, 15], strides = [1, 1]} : vector<8x16xf32> to vector<8x15xf32>
    %171 = tpu.concatenate %170, %167 in 1 : vector<8x15xf32>, vector<8x1xf32> -> vector<8x16xf32>
    %c15 = arith.constant 15 : index
    %172 = memref.load %arg1[%c15] : memref<72xf32, #tpu.memory_space<smem>>
    %173 = vector.broadcast %172 : f32 to vector<8x16xf32>
    %174 = arith.mulf %169, %173 : vector<8x16xf32>
    %175 = arith.addf %160, %174 : vector<8x16xf32>
    %c51 = arith.constant 51 : index
    %176 = memref.load %arg1[%c51] : memref<72xf32, #tpu.memory_space<smem>>
    %177 = vector.broadcast %176 : f32 to vector<8x16xf32>
    %178 = arith.mulf %169, %177 : vector<8x16xf32>
    %179 = arith.addf %164, %178 : vector<8x16xf32>
    %c16 = arith.constant 16 : index
    %180 = memref.load %arg1[%c16] : memref<72xf32, #tpu.memory_space<smem>>
    %181 = vector.broadcast %180 : f32 to vector<8x16xf32>
    %182 = arith.mulf %166, %181 : vector<8x16xf32>
    %183 = arith.addf %175, %182 : vector<8x16xf32>
    %c52 = arith.constant 52 : index
    %184 = memref.load %arg1[%c52] : memref<72xf32, #tpu.memory_space<smem>>
    %185 = vector.broadcast %184 : f32 to vector<8x16xf32>
    %186 = arith.mulf %166, %185 : vector<8x16xf32>
    %187 = arith.addf %179, %186 : vector<8x16xf32>
    %c17 = arith.constant 17 : index
    %188 = memref.load %arg1[%c17] : memref<72xf32, #tpu.memory_space<smem>>
    %189 = vector.broadcast %188 : f32 to vector<8x16xf32>
    %190 = arith.mulf %171, %189 : vector<8x16xf32>
    %191 = arith.addf %183, %190 : vector<8x16xf32>
    %c53 = arith.constant 53 : index
    %192 = memref.load %arg1[%c53] : memref<72xf32, #tpu.memory_space<smem>>
    %193 = vector.broadcast %192 : f32 to vector<8x16xf32>
    %194 = arith.mulf %171, %193 : vector<8x16xf32>
    %195 = arith.addf %187, %194 : vector<8x16xf32>
    %c0_37 = arith.constant 0 : index
    %c2_38 = arith.constant 2 : index
    %c0_39 = arith.constant 0 : index
    %c0_40 = arith.constant 0 : index
    %196 = vector.load %arg3[%c0_37, %c2_38, %c0_39, %c0_40] : memref<1x4x16x16xf32, #tpu.memory_space<vmem>>, vector<1x1x7x16xf32>
    %197 = vector.shape_cast %196 : vector<1x1x7x16xf32> to vector<7x16xf32>
    %cst_41 = arith.constant 0.000000e+00 : f32
    %198 = vector.broadcast %cst_41 : f32 to vector<1x16xf32>
    %199 = tpu.concatenate %198, %197 in 0 : vector<1x16xf32>, vector<7x16xf32> -> vector<8x16xf32>
    %cst_42 = arith.constant 0.000000e+00 : f32
    %200 = vector.broadcast %cst_42 : f32 to vector<8x1xf32>
    %201 = vector.extract_strided_slice %199 {offsets = [0, 0], sizes = [8, 15], strides = [1, 1]} : vector<8x16xf32> to vector<8x15xf32>
    %202 = tpu.concatenate %200, %201 in 1 : vector<8x1xf32>, vector<8x15xf32> -> vector<8x16xf32>
    %203 = vector.extract_strided_slice %199 {offsets = [0, 1], sizes = [8, 15], strides = [1, 1]} : vector<8x16xf32> to vector<8x15xf32>
    %204 = tpu.concatenate %203, %200 in 1 : vector<8x15xf32>, vector<8x1xf32> -> vector<8x16xf32>
    %c18 = arith.constant 18 : index
    %205 = memref.load %arg1[%c18] : memref<72xf32, #tpu.memory_space<smem>>
    %206 = vector.broadcast %205 : f32 to vector<8x16xf32>
    %207 = arith.mulf %202, %206 : vector<8x16xf32>
    %208 = arith.addf %191, %207 : vector<8x16xf32>
    %c54 = arith.constant 54 : index
    %209 = memref.load %arg1[%c54] : memref<72xf32, #tpu.memory_space<smem>>
    %210 = vector.broadcast %209 : f32 to vector<8x16xf32>
    %211 = arith.mulf %202, %210 : vector<8x16xf32>
    %212 = arith.addf %195, %211 : vector<8x16xf32>
    %c19 = arith.constant 19 : index
    %213 = memref.load %arg1[%c19] : memref<72xf32, #tpu.memory_space<smem>>
    %214 = vector.broadcast %213 : f32 to vector<8x16xf32>
    %215 = arith.mulf %199, %214 : vector<8x16xf32>
    %216 = arith.addf %208, %215 : vector<8x16xf32>
    %c55 = arith.constant 55 : index
    %217 = memref.load %arg1[%c55] : memref<72xf32, #tpu.memory_space<smem>>
    %218 = vector.broadcast %217 : f32 to vector<8x16xf32>
    %219 = arith.mulf %199, %218 : vector<8x16xf32>
    %220 = arith.addf %212, %219 : vector<8x16xf32>
    %c20 = arith.constant 20 : index
    %221 = memref.load %arg1[%c20] : memref<72xf32, #tpu.memory_space<smem>>
    %222 = vector.broadcast %221 : f32 to vector<8x16xf32>
    %223 = arith.mulf %204, %222 : vector<8x16xf32>
    %224 = arith.addf %216, %223 : vector<8x16xf32>
    %c56 = arith.constant 56 : index
    %225 = memref.load %arg1[%c56] : memref<72xf32, #tpu.memory_space<smem>>
    %226 = vector.broadcast %225 : f32 to vector<8x16xf32>
    %227 = arith.mulf %204, %226 : vector<8x16xf32>
    %228 = arith.addf %220, %227 : vector<8x16xf32>
    %c0_43 = arith.constant 0 : index
    %c2_44 = arith.constant 2 : index
    %c0_45 = arith.constant 0 : index
    %c0_46 = arith.constant 0 : index
    %229 = vector.load %arg3[%c0_43, %c2_44, %c0_45, %c0_46] : memref<1x4x16x16xf32, #tpu.memory_space<vmem>>, vector<1x1x8x16xf32>
    %230 = vector.shape_cast %229 : vector<1x1x8x16xf32> to vector<8x16xf32>
    %cst_47 = arith.constant 0.000000e+00 : f32
    %231 = vector.broadcast %cst_47 : f32 to vector<8x1xf32>
    %232 = vector.extract_strided_slice %230 {offsets = [0, 0], sizes = [8, 15], strides = [1, 1]} : vector<8x16xf32> to vector<8x15xf32>
    %233 = tpu.concatenate %231, %232 in 1 : vector<8x1xf32>, vector<8x15xf32> -> vector<8x16xf32>
    %234 = vector.extract_strided_slice %230 {offsets = [0, 1], sizes = [8, 15], strides = [1, 1]} : vector<8x16xf32> to vector<8x15xf32>
    %235 = tpu.concatenate %234, %231 in 1 : vector<8x15xf32>, vector<8x1xf32> -> vector<8x16xf32>
    %c21 = arith.constant 21 : index
    %236 = memref.load %arg1[%c21] : memref<72xf32, #tpu.memory_space<smem>>
    %237 = vector.broadcast %236 : f32 to vector<8x16xf32>
    %238 = arith.mulf %233, %237 : vector<8x16xf32>
    %239 = arith.addf %224, %238 : vector<8x16xf32>
    %c57 = arith.constant 57 : index
    %240 = memref.load %arg1[%c57] : memref<72xf32, #tpu.memory_space<smem>>
    %241 = vector.broadcast %240 : f32 to vector<8x16xf32>
    %242 = arith.mulf %233, %241 : vector<8x16xf32>
    %243 = arith.addf %228, %242 : vector<8x16xf32>
    %c22 = arith.constant 22 : index
    %244 = memref.load %arg1[%c22] : memref<72xf32, #tpu.memory_space<smem>>
    %245 = vector.broadcast %244 : f32 to vector<8x16xf32>
    %246 = arith.mulf %230, %245 : vector<8x16xf32>
    %247 = arith.addf %239, %246 : vector<8x16xf32>
    %c58 = arith.constant 58 : index
    %248 = memref.load %arg1[%c58] : memref<72xf32, #tpu.memory_space<smem>>
    %249 = vector.broadcast %248 : f32 to vector<8x16xf32>
    %250 = arith.mulf %230, %249 : vector<8x16xf32>
    %251 = arith.addf %243, %250 : vector<8x16xf32>
    %c23 = arith.constant 23 : index
    %252 = memref.load %arg1[%c23] : memref<72xf32, #tpu.memory_space<smem>>
    %253 = vector.broadcast %252 : f32 to vector<8x16xf32>
    %254 = arith.mulf %235, %253 : vector<8x16xf32>
    %255 = arith.addf %247, %254 : vector<8x16xf32>
    %c59 = arith.constant 59 : index
    %256 = memref.load %arg1[%c59] : memref<72xf32, #tpu.memory_space<smem>>
    %257 = vector.broadcast %256 : f32 to vector<8x16xf32>
    %258 = arith.mulf %235, %257 : vector<8x16xf32>
    %259 = arith.addf %251, %258 : vector<8x16xf32>
    %c0_48 = arith.constant 0 : index
    %c2_49 = arith.constant 2 : index
    %c1_50 = arith.constant 1 : index
    %c0_51 = arith.constant 0 : index
    %260 = vector.load %arg3[%c0_48, %c2_49, %c1_50, %c0_51] : memref<1x4x16x16xf32, #tpu.memory_space<vmem>>, vector<1x1x8x16xf32>
    %261 = vector.shape_cast %260 : vector<1x1x8x16xf32> to vector<8x16xf32>
    %cst_52 = arith.constant 0.000000e+00 : f32
    %262 = vector.broadcast %cst_52 : f32 to vector<8x1xf32>
    %263 = vector.extract_strided_slice %261 {offsets = [0, 0], sizes = [8, 15], strides = [1, 1]} : vector<8x16xf32> to vector<8x15xf32>
    %264 = tpu.concatenate %262, %263 in 1 : vector<8x1xf32>, vector<8x15xf32> -> vector<8x16xf32>
    %265 = vector.extract_strided_slice %261 {offsets = [0, 1], sizes = [8, 15], strides = [1, 1]} : vector<8x16xf32> to vector<8x15xf32>
    %266 = tpu.concatenate %265, %262 in 1 : vector<8x15xf32>, vector<8x1xf32> -> vector<8x16xf32>
    %c24 = arith.constant 24 : index
    %267 = memref.load %arg1[%c24] : memref<72xf32, #tpu.memory_space<smem>>
    %268 = vector.broadcast %267 : f32 to vector<8x16xf32>
    %269 = arith.mulf %264, %268 : vector<8x16xf32>
    %270 = arith.addf %255, %269 : vector<8x16xf32>
    %c60 = arith.constant 60 : index
    %271 = memref.load %arg1[%c60] : memref<72xf32, #tpu.memory_space<smem>>
    %272 = vector.broadcast %271 : f32 to vector<8x16xf32>
    %273 = arith.mulf %264, %272 : vector<8x16xf32>
    %274 = arith.addf %259, %273 : vector<8x16xf32>
    %c25 = arith.constant 25 : index
    %275 = memref.load %arg1[%c25] : memref<72xf32, #tpu.memory_space<smem>>
    %276 = vector.broadcast %275 : f32 to vector<8x16xf32>
    %277 = arith.mulf %261, %276 : vector<8x16xf32>
    %278 = arith.addf %270, %277 : vector<8x16xf32>
    %c61 = arith.constant 61 : index
    %279 = memref.load %arg1[%c61] : memref<72xf32, #tpu.memory_space<smem>>
    %280 = vector.broadcast %279 : f32 to vector<8x16xf32>
    %281 = arith.mulf %261, %280 : vector<8x16xf32>
    %282 = arith.addf %274, %281 : vector<8x16xf32>
    %c26 = arith.constant 26 : index
    %283 = memref.load %arg1[%c26] : memref<72xf32, #tpu.memory_space<smem>>
    %284 = vector.broadcast %283 : f32 to vector<8x16xf32>
    %285 = arith.mulf %266, %284 : vector<8x16xf32>
    %286 = arith.addf %278, %285 : vector<8x16xf32>
    %c62 = arith.constant 62 : index
    %287 = memref.load %arg1[%c62] : memref<72xf32, #tpu.memory_space<smem>>
    %288 = vector.broadcast %287 : f32 to vector<8x16xf32>
    %289 = arith.mulf %266, %288 : vector<8x16xf32>
    %290 = arith.addf %282, %289 : vector<8x16xf32>
    %c0_53 = arith.constant 0 : index
    %c3_54 = arith.constant 3 : index
    %c0_55 = arith.constant 0 : index
    %c0_56 = arith.constant 0 : index
    %291 = vector.load %arg3[%c0_53, %c3_54, %c0_55, %c0_56] : memref<1x4x16x16xf32, #tpu.memory_space<vmem>>, vector<1x1x7x16xf32>
    %292 = vector.shape_cast %291 : vector<1x1x7x16xf32> to vector<7x16xf32>
    %cst_57 = arith.constant 0.000000e+00 : f32
    %293 = vector.broadcast %cst_57 : f32 to vector<1x16xf32>
    %294 = tpu.concatenate %293, %292 in 0 : vector<1x16xf32>, vector<7x16xf32> -> vector<8x16xf32>
    %cst_58 = arith.constant 0.000000e+00 : f32
    %295 = vector.broadcast %cst_58 : f32 to vector<8x1xf32>
    %296 = vector.extract_strided_slice %294 {offsets = [0, 0], sizes = [8, 15], strides = [1, 1]} : vector<8x16xf32> to vector<8x15xf32>
    %297 = tpu.concatenate %295, %296 in 1 : vector<8x1xf32>, vector<8x15xf32> -> vector<8x16xf32>
    %298 = vector.extract_strided_slice %294 {offsets = [0, 1], sizes = [8, 15], strides = [1, 1]} : vector<8x16xf32> to vector<8x15xf32>
    %299 = tpu.concatenate %298, %295 in 1 : vector<8x15xf32>, vector<8x1xf32> -> vector<8x16xf32>
    %c27 = arith.constant 27 : index
    %300 = memref.load %arg1[%c27] : memref<72xf32, #tpu.memory_space<smem>>
    %301 = vector.broadcast %300 : f32 to vector<8x16xf32>
    %302 = arith.mulf %297, %301 : vector<8x16xf32>
    %303 = arith.addf %286, %302 : vector<8x16xf32>
    %c63 = arith.constant 63 : index
    %304 = memref.load %arg1[%c63] : memref<72xf32, #tpu.memory_space<smem>>
    %305 = vector.broadcast %304 : f32 to vector<8x16xf32>
    %306 = arith.mulf %297, %305 : vector<8x16xf32>
    %307 = arith.addf %290, %306 : vector<8x16xf32>
    %c28 = arith.constant 28 : index
    %308 = memref.load %arg1[%c28] : memref<72xf32, #tpu.memory_space<smem>>
    %309 = vector.broadcast %308 : f32 to vector<8x16xf32>
    %310 = arith.mulf %294, %309 : vector<8x16xf32>
    %311 = arith.addf %303, %310 : vector<8x16xf32>
    %c64 = arith.constant 64 : index
    %312 = memref.load %arg1[%c64] : memref<72xf32, #tpu.memory_space<smem>>
    %313 = vector.broadcast %312 : f32 to vector<8x16xf32>
    %314 = arith.mulf %294, %313 : vector<8x16xf32>
    %315 = arith.addf %307, %314 : vector<8x16xf32>
    %c29 = arith.constant 29 : index
    %316 = memref.load %arg1[%c29] : memref<72xf32, #tpu.memory_space<smem>>
    %317 = vector.broadcast %316 : f32 to vector<8x16xf32>
    %318 = arith.mulf %299, %317 : vector<8x16xf32>
    %319 = arith.addf %311, %318 : vector<8x16xf32>
    %c65 = arith.constant 65 : index
    %320 = memref.load %arg1[%c65] : memref<72xf32, #tpu.memory_space<smem>>
    %321 = vector.broadcast %320 : f32 to vector<8x16xf32>
    %322 = arith.mulf %299, %321 : vector<8x16xf32>
    %323 = arith.addf %315, %322 : vector<8x16xf32>
    %c0_59 = arith.constant 0 : index
    %c3_60 = arith.constant 3 : index
    %c0_61 = arith.constant 0 : index
    %c0_62 = arith.constant 0 : index
    %324 = vector.load %arg3[%c0_59, %c3_60, %c0_61, %c0_62] : memref<1x4x16x16xf32, #tpu.memory_space<vmem>>, vector<1x1x8x16xf32>
    %325 = vector.shape_cast %324 : vector<1x1x8x16xf32> to vector<8x16xf32>
    %cst_63 = arith.constant 0.000000e+00 : f32
    %326 = vector.broadcast %cst_63 : f32 to vector<8x1xf32>
    %327 = vector.extract_strided_slice %325 {offsets = [0, 0], sizes = [8, 15], strides = [1, 1]} : vector<8x16xf32> to vector<8x15xf32>
    %328 = tpu.concatenate %326, %327 in 1 : vector<8x1xf32>, vector<8x15xf32> -> vector<8x16xf32>
    %329 = vector.extract_strided_slice %325 {offsets = [0, 1], sizes = [8, 15], strides = [1, 1]} : vector<8x16xf32> to vector<8x15xf32>
    %330 = tpu.concatenate %329, %326 in 1 : vector<8x15xf32>, vector<8x1xf32> -> vector<8x16xf32>
    %c30 = arith.constant 30 : index
    %331 = memref.load %arg1[%c30] : memref<72xf32, #tpu.memory_space<smem>>
    %332 = vector.broadcast %331 : f32 to vector<8x16xf32>
    %333 = arith.mulf %328, %332 : vector<8x16xf32>
    %334 = arith.addf %319, %333 : vector<8x16xf32>
    %c66 = arith.constant 66 : index
    %335 = memref.load %arg1[%c66] : memref<72xf32, #tpu.memory_space<smem>>
    %336 = vector.broadcast %335 : f32 to vector<8x16xf32>
    %337 = arith.mulf %328, %336 : vector<8x16xf32>
    %338 = arith.addf %323, %337 : vector<8x16xf32>
    %c31 = arith.constant 31 : index
    %339 = memref.load %arg1[%c31] : memref<72xf32, #tpu.memory_space<smem>>
    %340 = vector.broadcast %339 : f32 to vector<8x16xf32>
    %341 = arith.mulf %325, %340 : vector<8x16xf32>
    %342 = arith.addf %334, %341 : vector<8x16xf32>
    %c67 = arith.constant 67 : index
    %343 = memref.load %arg1[%c67] : memref<72xf32, #tpu.memory_space<smem>>
    %344 = vector.broadcast %343 : f32 to vector<8x16xf32>
    %345 = arith.mulf %325, %344 : vector<8x16xf32>
    %346 = arith.addf %338, %345 : vector<8x16xf32>
    %c32 = arith.constant 32 : index
    %347 = memref.load %arg1[%c32] : memref<72xf32, #tpu.memory_space<smem>>
    %348 = vector.broadcast %347 : f32 to vector<8x16xf32>
    %349 = arith.mulf %330, %348 : vector<8x16xf32>
    %350 = arith.addf %342, %349 : vector<8x16xf32>
    %c68 = arith.constant 68 : index
    %351 = memref.load %arg1[%c68] : memref<72xf32, #tpu.memory_space<smem>>
    %352 = vector.broadcast %351 : f32 to vector<8x16xf32>
    %353 = arith.mulf %330, %352 : vector<8x16xf32>
    %354 = arith.addf %346, %353 : vector<8x16xf32>
    %c0_64 = arith.constant 0 : index
    %c3_65 = arith.constant 3 : index
    %c1_66 = arith.constant 1 : index
    %c0_67 = arith.constant 0 : index
    %355 = vector.load %arg3[%c0_64, %c3_65, %c1_66, %c0_67] : memref<1x4x16x16xf32, #tpu.memory_space<vmem>>, vector<1x1x8x16xf32>
    %356 = vector.shape_cast %355 : vector<1x1x8x16xf32> to vector<8x16xf32>
    %cst_68 = arith.constant 0.000000e+00 : f32
    %357 = vector.broadcast %cst_68 : f32 to vector<8x1xf32>
    %358 = vector.extract_strided_slice %356 {offsets = [0, 0], sizes = [8, 15], strides = [1, 1]} : vector<8x16xf32> to vector<8x15xf32>
    %359 = tpu.concatenate %357, %358 in 1 : vector<8x1xf32>, vector<8x15xf32> -> vector<8x16xf32>
    %360 = vector.extract_strided_slice %356 {offsets = [0, 1], sizes = [8, 15], strides = [1, 1]} : vector<8x16xf32> to vector<8x15xf32>
    %361 = tpu.concatenate %360, %357 in 1 : vector<8x15xf32>, vector<8x1xf32> -> vector<8x16xf32>
    %c33 = arith.constant 33 : index
    %362 = memref.load %arg1[%c33] : memref<72xf32, #tpu.memory_space<smem>>
    %363 = vector.broadcast %362 : f32 to vector<8x16xf32>
    %364 = arith.mulf %359, %363 : vector<8x16xf32>
    %365 = arith.addf %350, %364 : vector<8x16xf32>
    %c69 = arith.constant 69 : index
    %366 = memref.load %arg1[%c69] : memref<72xf32, #tpu.memory_space<smem>>
    %367 = vector.broadcast %366 : f32 to vector<8x16xf32>
    %368 = arith.mulf %359, %367 : vector<8x16xf32>
    %369 = arith.addf %354, %368 : vector<8x16xf32>
    %c34 = arith.constant 34 : index
    %370 = memref.load %arg1[%c34] : memref<72xf32, #tpu.memory_space<smem>>
    %371 = vector.broadcast %370 : f32 to vector<8x16xf32>
    %372 = arith.mulf %356, %371 : vector<8x16xf32>
    %373 = arith.addf %365, %372 : vector<8x16xf32>
    %c70 = arith.constant 70 : index
    %374 = memref.load %arg1[%c70] : memref<72xf32, #tpu.memory_space<smem>>
    %375 = vector.broadcast %374 : f32 to vector<8x16xf32>
    %376 = arith.mulf %356, %375 : vector<8x16xf32>
    %377 = arith.addf %369, %376 : vector<8x16xf32>
    %c35 = arith.constant 35 : index
    %378 = memref.load %arg1[%c35] : memref<72xf32, #tpu.memory_space<smem>>
    %379 = vector.broadcast %378 : f32 to vector<8x16xf32>
    %380 = arith.mulf %361, %379 : vector<8x16xf32>
    %381 = arith.addf %373, %380 : vector<8x16xf32>
    %c71 = arith.constant 71 : index
    %382 = memref.load %arg1[%c71] : memref<72xf32, #tpu.memory_space<smem>>
    %383 = vector.broadcast %382 : f32 to vector<8x16xf32>
    %384 = arith.mulf %361, %383 : vector<8x16xf32>
    %385 = arith.addf %377, %384 : vector<8x16xf32>
    %c0_69 = arith.constant 0 : index
    %386 = memref.load %arg2[%c0_69] : memref<2xf32, #tpu.memory_space<smem>>
    %387 = vector.broadcast %386 : f32 to vector<8x16xf32>
    %388 = arith.addf %381, %387 : vector<8x16xf32>
    %c0_70 = arith.constant 0 : index
    %c0_71 = arith.constant 0 : index
    %c0_72 = arith.constant 0 : index
    %c0_73 = arith.constant 0 : index
    %389 = vector.load %arg4[%c0_70, %c0_71, %c0_72, %c0_73] : memref<1x2x16x16xf32, #tpu.memory_space<vmem>>, vector<1x1x8x16xf32>
    %390 = vector.shape_cast %389 : vector<1x1x8x16xf32> to vector<8x16xf32>
    %391 = vector.shape_cast %388 : vector<8x16xf32> to vector<1x1x8x16xf32>
    tpu.vector_store %arg4[%c0_70, %c0_71, %c0_72, %c0_73], %391 {strides = array<i32>} : memref<1x2x16x16xf32, #tpu.memory_space<vmem>>, vector<1x1x8x16xf32>,
    %cst_74 = arith.constant dense<0.000000e+00> : vector<16xf32>
    %392 = vector.multi_reduction <add>, %381, %cst_74 [0] : vector<8x16xf32> to vector<16xf32>
    %393 = vector.shape_cast %392 : vector<16xf32> to vector<1x16xf32>
    %394 = arith.addf %0, %393 : vector<1x16xf32>
    %395 = arith.mulf %381, %381 : vector<8x16xf32>
    %cst_75 = arith.constant dense<0.000000e+00> : vector<16xf32>
    %396 = vector.multi_reduction <add>, %395, %cst_75 [0] : vector<8x16xf32> to vector<16xf32>
    %397 = vector.shape_cast %396 : vector<16xf32> to vector<1x16xf32>
    %398 = arith.addf %2, %397 : vector<1x16xf32>
    %c1_76 = arith.constant 1 : index
    %399 = memref.load %arg2[%c1_76] : memref<2xf32, #tpu.memory_space<smem>>
    %400 = vector.broadcast %399 : f32 to vector<8x16xf32>
    %401 = arith.addf %385, %400 : vector<8x16xf32>
    %c0_77 = arith.constant 0 : index
    %c1_78 = arith.constant 1 : index
    %c0_79 = arith.constant 0 : index
    %c0_80 = arith.constant 0 : index
    %402 = vector.load %arg4[%c0_77, %c1_78, %c0_79, %c0_80] : memref<1x2x16x16xf32, #tpu.memory_space<vmem>>, vector<1x1x8x16xf32>
    %403 = vector.shape_cast %402 : vector<1x1x8x16xf32> to vector<8x16xf32>
    %404 = vector.shape_cast %401 : vector<8x16xf32> to vector<1x1x8x16xf32>
    tpu.vector_store %arg4[%c0_77, %c1_78, %c0_79, %c0_80], %404 {strides = array<i32>} : memref<1x2x16x16xf32, #tpu.memory_space<vmem>>, vector<1x1x8x16xf32>,
    %cst_81 = arith.constant dense<0.000000e+00> : vector<16xf32>
    %405 = vector.multi_reduction <add>, %385, %cst_81 [0] : vector<8x16xf32> to vector<16xf32>
    %406 = vector.shape_cast %405 : vector<16xf32> to vector<1x16xf32>
    %407 = arith.addf %1, %406 : vector<1x16xf32>
    %408 = arith.mulf %385, %385 : vector<8x16xf32>
    %cst_82 = arith.constant dense<0.000000e+00> : vector<16xf32>
    %409 = vector.multi_reduction <add>, %408, %cst_82 [0] : vector<8x16xf32> to vector<16xf32>
    %410 = vector.shape_cast %409 : vector<16xf32> to vector<1x16xf32>
    %411 = arith.addf %3, %410 : vector<1x16xf32>
    %cst_83 = arith.constant 0.000000e+00 : f32
    %412 = vector.broadcast %cst_83 : f32 to vector<8x16xf32>
    %cst_84 = arith.constant 0.000000e+00 : f32
    %413 = vector.broadcast %cst_84 : f32 to vector<8x16xf32>
    %c0_85 = arith.constant 0 : index
    %c0_86 = arith.constant 0 : index
    %c7_87 = arith.constant 7 : index
    %c0_88 = arith.constant 0 : index
    %414 = vector.load %arg3[%c0_85, %c0_86, %c7_87, %c0_88] : memref<1x4x16x16xf32, #tpu.memory_space<vmem>>, vector<1x1x8x16xf32>
    %415 = vector.shape_cast %414 : vector<1x1x8x16xf32> to vector<8x16xf32>
    %cst_89 = arith.constant 0.000000e+00 : f32
    %416 = vector.broadcast %cst_89 : f32 to vector<8x1xf32>
    %417 = vector.extract_strided_slice %415 {offsets = [0, 0], sizes = [8, 15], strides = [1, 1]} : vector<8x16xf32> to vector<8x15xf32>
    %418 = tpu.concatenate %416, %417 in 1 : vector<8x1xf32>, vector<8x15xf32> -> vector<8x16xf32>
    %419 = vector.extract_strided_slice %415 {offsets = [0, 1], sizes = [8, 15], strides = [1, 1]} : vector<8x16xf32> to vector<8x15xf32>
    %420 = tpu.concatenate %419, %416 in 1 : vector<8x15xf32>, vector<8x1xf32> -> vector<8x16xf32>
    %c0_90 = arith.constant 0 : index
    %421 = memref.load %arg1[%c0_90] : memref<72xf32, #tpu.memory_space<smem>>
    %422 = vector.broadcast %421 : f32 to vector<8x16xf32>
    %423 = arith.mulf %418, %422 : vector<8x16xf32>
    %424 = arith.addf %412, %423 : vector<8x16xf32>
    %c36_91 = arith.constant 36 : index
    %425 = memref.load %arg1[%c36_91] : memref<72xf32, #tpu.memory_space<smem>>
    %426 = vector.broadcast %425 : f32 to vector<8x16xf32>
    %427 = arith.mulf %418, %426 : vector<8x16xf32>
    %428 = arith.addf %413, %427 : vector<8x16xf32>
    %c1_92 = arith.constant 1 : index
    %429 = memref.load %arg1[%c1_92] : memref<72xf32, #tpu.memory_space<smem>>
    %430 = vector.broadcast %429 : f32 to vector<8x16xf32>
    %431 = arith.mulf %415, %430 : vector<8x16xf32>
    %432 = arith.addf %424, %431 : vector<8x16xf32>
    %c37_93 = arith.constant 37 : index
    %433 = memref.load %arg1[%c37_93] : memref<72xf32, #tpu.memory_space<smem>>
    %434 = vector.broadcast %433 : f32 to vector<8x16xf32>
    %435 = arith.mulf %415, %434 : vector<8x16xf32>
    %436 = arith.addf %428, %435 : vector<8x16xf32>
    %c2_94 = arith.constant 2 : index
    %437 = memref.load %arg1[%c2_94] : memref<72xf32, #tpu.memory_space<smem>>
    %438 = vector.broadcast %437 : f32 to vector<8x16xf32>
    %439 = arith.mulf %420, %438 : vector<8x16xf32>
    %440 = arith.addf %432, %439 : vector<8x16xf32>
    %c38_95 = arith.constant 38 : index
    %441 = memref.load %arg1[%c38_95] : memref<72xf32, #tpu.memory_space<smem>>
    %442 = vector.broadcast %441 : f32 to vector<8x16xf32>
    %443 = arith.mulf %420, %442 : vector<8x16xf32>
    %444 = arith.addf %436, %443 : vector<8x16xf32>
    %c0_96 = arith.constant 0 : index
    %c0_97 = arith.constant 0 : index
    %c8_98 = arith.constant 8 : index
    %c0_99 = arith.constant 0 : index
    %445 = vector.load %arg3[%c0_96, %c0_97, %c8_98, %c0_99] : memref<1x4x16x16xf32, #tpu.memory_space<vmem>>, vector<1x1x8x16xf32>
    %446 = vector.shape_cast %445 : vector<1x1x8x16xf32> to vector<8x16xf32>
    %cst_100 = arith.constant 0.000000e+00 : f32
    %447 = vector.broadcast %cst_100 : f32 to vector<8x1xf32>
    %448 = vector.extract_strided_slice %446 {offsets = [0, 0], sizes = [8, 15], strides = [1, 1]} : vector<8x16xf32> to vector<8x15xf32>
    %449 = tpu.concatenate %447, %448 in 1 : vector<8x1xf32>, vector<8x15xf32> -> vector<8x16xf32>
    %450 = vector.extract_strided_slice %446 {offsets = [0, 1], sizes = [8, 15], strides = [1, 1]} : vector<8x16xf32> to vector<8x15xf32>
    %451 = tpu.concatenate %450, %447 in 1 : vector<8x15xf32>, vector<8x1xf32> -> vector<8x16xf32>
    %c3_101 = arith.constant 3 : index
    %452 = memref.load %arg1[%c3_101] : memref<72xf32, #tpu.memory_space<smem>>
    %453 = vector.broadcast %452 : f32 to vector<8x16xf32>
    %454 = arith.mulf %449, %453 : vector<8x16xf32>
    %455 = arith.addf %440, %454 : vector<8x16xf32>
    %c39_102 = arith.constant 39 : index
    %456 = memref.load %arg1[%c39_102] : memref<72xf32, #tpu.memory_space<smem>>
    %457 = vector.broadcast %456 : f32 to vector<8x16xf32>
    %458 = arith.mulf %449, %457 : vector<8x16xf32>
    %459 = arith.addf %444, %458 : vector<8x16xf32>
    %c4_103 = arith.constant 4 : index
    %460 = memref.load %arg1[%c4_103] : memref<72xf32, #tpu.memory_space<smem>>
    %461 = vector.broadcast %460 : f32 to vector<8x16xf32>
    %462 = arith.mulf %446, %461 : vector<8x16xf32>
    %463 = arith.addf %455, %462 : vector<8x16xf32>
    %c40_104 = arith.constant 40 : index
    %464 = memref.load %arg1[%c40_104] : memref<72xf32, #tpu.memory_space<smem>>
    %465 = vector.broadcast %464 : f32 to vector<8x16xf32>
    %466 = arith.mulf %446, %465 : vector<8x16xf32>
    %467 = arith.addf %459, %466 : vector<8x16xf32>
    %c5_105 = arith.constant 5 : index
    %468 = memref.load %arg1[%c5_105] : memref<72xf32, #tpu.memory_space<smem>>
    %469 = vector.broadcast %468 : f32 to vector<8x16xf32>
    %470 = arith.mulf %451, %469 : vector<8x16xf32>
    %471 = arith.addf %463, %470 : vector<8x16xf32>
    %c41_106 = arith.constant 41 : index
    %472 = memref.load %arg1[%c41_106] : memref<72xf32, #tpu.memory_space<smem>>
    %473 = vector.broadcast %472 : f32 to vector<8x16xf32>
    %474 = arith.mulf %451, %473 : vector<8x16xf32>
    %475 = arith.addf %467, %474 : vector<8x16xf32>
    %c0_107 = arith.constant 0 : index
    %c0_108 = arith.constant 0 : index
    %c9_109 = arith.constant 9 : index
    %c0_110 = arith.constant 0 : index
    %476 = vector.load %arg3[%c0_107, %c0_108, %c9_109, %c0_110] : memref<1x4x16x16xf32, #tpu.memory_space<vmem>>, vector<1x1x7x16xf32>
    %477 = vector.shape_cast %476 : vector<1x1x7x16xf32> to vector<7x16xf32>
    %cst_111 = arith.constant 0.000000e+00 : f32
    %478 = vector.broadcast %cst_111 : f32 to vector<1x16xf32>
    %479 = tpu.concatenate %477, %478 in 0 : vector<7x16xf32>, vector<1x16xf32> -> vector<8x16xf32>
    %cst_112 = arith.constant 0.000000e+00 : f32
    %480 = vector.broadcast %cst_112 : f32 to vector<8x1xf32>
    %481 = vector.extract_strided_slice %479 {offsets = [0, 0], sizes = [8, 15], strides = [1, 1]} : vector<8x16xf32> to vector<8x15xf32>
    %482 = tpu.concatenate %480, %481 in 1 : vector<8x1xf32>, vector<8x15xf32> -> vector<8x16xf32>
    %483 = vector.extract_strided_slice %479 {offsets = [0, 1], sizes = [8, 15], strides = [1, 1]} : vector<8x16xf32> to vector<8x15xf32>
    %484 = tpu.concatenate %483, %480 in 1 : vector<8x15xf32>, vector<8x1xf32> -> vector<8x16xf32>
    %c6_113 = arith.constant 6 : index
    %485 = memref.load %arg1[%c6_113] : memref<72xf32, #tpu.memory_space<smem>>
    %486 = vector.broadcast %485 : f32 to vector<8x16xf32>
    %487 = arith.mulf %482, %486 : vector<8x16xf32>
    %488 = arith.addf %471, %487 : vector<8x16xf32>
    %c42_114 = arith.constant 42 : index
    %489 = memref.load %arg1[%c42_114] : memref<72xf32, #tpu.memory_space<smem>>
    %490 = vector.broadcast %489 : f32 to vector<8x16xf32>
    %491 = arith.mulf %482, %490 : vector<8x16xf32>
    %492 = arith.addf %475, %491 : vector<8x16xf32>
    %c7_115 = arith.constant 7 : index
    %493 = memref.load %arg1[%c7_115] : memref<72xf32, #tpu.memory_space<smem>>
    %494 = vector.broadcast %493 : f32 to vector<8x16xf32>
    %495 = arith.mulf %479, %494 : vector<8x16xf32>
    %496 = arith.addf %488, %495 : vector<8x16xf32>
    %c43_116 = arith.constant 43 : index
    %497 = memref.load %arg1[%c43_116] : memref<72xf32, #tpu.memory_space<smem>>
    %498 = vector.broadcast %497 : f32 to vector<8x16xf32>
    %499 = arith.mulf %479, %498 : vector<8x16xf32>
    %500 = arith.addf %492, %499 : vector<8x16xf32>
    %c8_117 = arith.constant 8 : index
    %501 = memref.load %arg1[%c8_117] : memref<72xf32, #tpu.memory_space<smem>>
    %502 = vector.broadcast %501 : f32 to vector<8x16xf32>
    %503 = arith.mulf %484, %502 : vector<8x16xf32>
    %504 = arith.addf %496, %503 : vector<8x16xf32>
    %c44_118 = arith.constant 44 : index
    %505 = memref.load %arg1[%c44_118] : memref<72xf32, #tpu.memory_space<smem>>
    %506 = vector.broadcast %505 : f32 to vector<8x16xf32>
    %507 = arith.mulf %484, %506 : vector<8x16xf32>
    %508 = arith.addf %500, %507 : vector<8x16xf32>
    %c0_119 = arith.constant 0 : index
    %c1_120 = arith.constant 1 : index
    %c7_121 = arith.constant 7 : index
    %c0_122 = arith.constant 0 : index
    %509 = vector.load %arg3[%c0_119, %c1_120, %c7_121, %c0_122] : memref<1x4x16x16xf32, #tpu.memory_space<vmem>>, vector<1x1x8x16xf32>
    %510 = vector.shape_cast %509 : vector<1x1x8x16xf32> to vector<8x16xf32>
    %cst_123 = arith.constant 0.000000e+00 : f32
    %511 = vector.broadcast %cst_123 : f32 to vector<8x1xf32>
    %512 = vector.extract_strided_slice %510 {offsets = [0, 0], sizes = [8, 15], strides = [1, 1]} : vector<8x16xf32> to vector<8x15xf32>
    %513 = tpu.concatenate %511, %512 in 1 : vector<8x1xf32>, vector<8x15xf32> -> vector<8x16xf32>
    %514 = vector.extract_strided_slice %510 {offsets = [0, 1], sizes = [8, 15], strides = [1, 1]} : vector<8x16xf32> to vector<8x15xf32>
    %515 = tpu.concatenate %514, %511 in 1 : vector<8x15xf32>, vector<8x1xf32> -> vector<8x16xf32>
    %c9_124 = arith.constant 9 : index
    %516 = memref.load %arg1[%c9_124] : memref<72xf32, #tpu.memory_space<smem>>
    %517 = vector.broadcast %516 : f32 to vector<8x16xf32>
    %518 = arith.mulf %513, %517 : vector<8x16xf32>
    %519 = arith.addf %504, %518 : vector<8x16xf32>
    %c45_125 = arith.constant 45 : index
    %520 = memref.load %arg1[%c45_125] : memref<72xf32, #tpu.memory_space<smem>>
    %521 = vector.broadcast %520 : f32 to vector<8x16xf32>
    %522 = arith.mulf %513, %521 : vector<8x16xf32>
    %523 = arith.addf %508, %522 : vector<8x16xf32>
    %c10_126 = arith.constant 10 : index
    %524 = memref.load %arg1[%c10_126] : memref<72xf32, #tpu.memory_space<smem>>
    %525 = vector.broadcast %524 : f32 to vector<8x16xf32>
    %526 = arith.mulf %510, %525 : vector<8x16xf32>
    %527 = arith.addf %519, %526 : vector<8x16xf32>
    %c46_127 = arith.constant 46 : index
    %528 = memref.load %arg1[%c46_127] : memref<72xf32, #tpu.memory_space<smem>>
    %529 = vector.broadcast %528 : f32 to vector<8x16xf32>
    %530 = arith.mulf %510, %529 : vector<8x16xf32>
    %531 = arith.addf %523, %530 : vector<8x16xf32>
    %c11_128 = arith.constant 11 : index
    %532 = memref.load %arg1[%c11_128] : memref<72xf32, #tpu.memory_space<smem>>
    %533 = vector.broadcast %532 : f32 to vector<8x16xf32>
    %534 = arith.mulf %515, %533 : vector<8x16xf32>
    %535 = arith.addf %527, %534 : vector<8x16xf32>
    %c47_129 = arith.constant 47 : index
    %536 = memref.load %arg1[%c47_129] : memref<72xf32, #tpu.memory_space<smem>>
    %537 = vector.broadcast %536 : f32 to vector<8x16xf32>
    %538 = arith.mulf %515, %537 : vector<8x16xf32>
    %539 = arith.addf %531, %538 : vector<8x16xf32>
    %c0_130 = arith.constant 0 : index
    %c1_131 = arith.constant 1 : index
    %c8_132 = arith.constant 8 : index
    %c0_133 = arith.constant 0 : index
    %540 = vector.load %arg3[%c0_130, %c1_131, %c8_132, %c0_133] : memref<1x4x16x16xf32, #tpu.memory_space<vmem>>, vector<1x1x8x16xf32>
    %541 = vector.shape_cast %540 : vector<1x1x8x16xf32> to vector<8x16xf32>
    %cst_134 = arith.constant 0.000000e+00 : f32
    %542 = vector.broadcast %cst_134 : f32 to vector<8x1xf32>
    %543 = vector.extract_strided_slice %541 {offsets = [0, 0], sizes = [8, 15], strides = [1, 1]} : vector<8x16xf32> to vector<8x15xf32>
    %544 = tpu.concatenate %542, %543 in 1 : vector<8x1xf32>, vector<8x15xf32> -> vector<8x16xf32>
    %545 = vector.extract_strided_slice %541 {offsets = [0, 1], sizes = [8, 15], strides = [1, 1]} : vector<8x16xf32> to vector<8x15xf32>
    %546 = tpu.concatenate %545, %542 in 1 : vector<8x15xf32>, vector<8x1xf32> -> vector<8x16xf32>
    %c12_135 = arith.constant 12 : index
    %547 = memref.load %arg1[%c12_135] : memref<72xf32, #tpu.memory_space<smem>>
    %548 = vector.broadcast %547 : f32 to vector<8x16xf32>
    %549 = arith.mulf %544, %548 : vector<8x16xf32>
    %550 = arith.addf %535, %549 : vector<8x16xf32>
    %c48_136 = arith.constant 48 : index
    %551 = memref.load %arg1[%c48_136] : memref<72xf32, #tpu.memory_space<smem>>
    %552 = vector.broadcast %551 : f32 to vector<8x16xf32>
    %553 = arith.mulf %544, %552 : vector<8x16xf32>
    %554 = arith.addf %539, %553 : vector<8x16xf32>
    %c13_137 = arith.constant 13 : index
    %555 = memref.load %arg1[%c13_137] : memref<72xf32, #tpu.memory_space<smem>>
    %556 = vector.broadcast %555 : f32 to vector<8x16xf32>
    %557 = arith.mulf %541, %556 : vector<8x16xf32>
    %558 = arith.addf %550, %557 : vector<8x16xf32>
    %c49_138 = arith.constant 49 : index
    %559 = memref.load %arg1[%c49_138] : memref<72xf32, #tpu.memory_space<smem>>
    %560 = vector.broadcast %559 : f32 to vector<8x16xf32>
    %561 = arith.mulf %541, %560 : vector<8x16xf32>
    %562 = arith.addf %554, %561 : vector<8x16xf32>
    %c14_139 = arith.constant 14 : index
    %563 = memref.load %arg1[%c14_139] : memref<72xf32, #tpu.memory_space<smem>>
    %564 = vector.broadcast %563 : f32 to vector<8x16xf32>
    %565 = arith.mulf %546, %564 : vector<8x16xf32>
    %566 = arith.addf %558, %565 : vector<8x16xf32>
    %c50_140 = arith.constant 50 : index
    %567 = memref.load %arg1[%c50_140] : memref<72xf32, #tpu.memory_space<smem>>
    %568 = vector.broadcast %567 : f32 to vector<8x16xf32>
    %569 = arith.mulf %546, %568 : vector<8x16xf32>
    %570 = arith.addf %562, %569 : vector<8x16xf32>
    %c0_141 = arith.constant 0 : index
    %c1_142 = arith.constant 1 : index
    %c9_143 = arith.constant 9 : index
    %c0_144 = arith.constant 0 : index
    %571 = vector.load %arg3[%c0_141, %c1_142, %c9_143, %c0_144] : memref<1x4x16x16xf32, #tpu.memory_space<vmem>>, vector<1x1x7x16xf32>
    %572 = vector.shape_cast %571 : vector<1x1x7x16xf32> to vector<7x16xf32>
    %cst_145 = arith.constant 0.000000e+00 : f32
    %573 = vector.broadcast %cst_145 : f32 to vector<1x16xf32>
    %574 = tpu.concatenate %572, %573 in 0 : vector<7x16xf32>, vector<1x16xf32> -> vector<8x16xf32>
    %cst_146 = arith.constant 0.000000e+00 : f32
    %575 = vector.broadcast %cst_146 : f32 to vector<8x1xf32>
    %576 = vector.extract_strided_slice %574 {offsets = [0, 0], sizes = [8, 15], strides = [1, 1]} : vector<8x16xf32> to vector<8x15xf32>
    %577 = tpu.concatenate %575, %576 in 1 : vector<8x1xf32>, vector<8x15xf32> -> vector<8x16xf32>
    %578 = vector.extract_strided_slice %574 {offsets = [0, 1], sizes = [8, 15], strides = [1, 1]} : vector<8x16xf32> to vector<8x15xf32>
    %579 = tpu.concatenate %578, %575 in 1 : vector<8x15xf32>, vector<8x1xf32> -> vector<8x16xf32>
    %c15_147 = arith.constant 15 : index
    %580 = memref.load %arg1[%c15_147] : memref<72xf32, #tpu.memory_space<smem>>
    %581 = vector.broadcast %580 : f32 to vector<8x16xf32>
    %582 = arith.mulf %577, %581 : vector<8x16xf32>
    %583 = arith.addf %566, %582 : vector<8x16xf32>
    %c51_148 = arith.constant 51 : index
    %584 = memref.load %arg1[%c51_148] : memref<72xf32, #tpu.memory_space<smem>>
    %585 = vector.broadcast %584 : f32 to vector<8x16xf32>
    %586 = arith.mulf %577, %585 : vector<8x16xf32>
    %587 = arith.addf %570, %586 : vector<8x16xf32>
    %c16_149 = arith.constant 16 : index
    %588 = memref.load %arg1[%c16_149] : memref<72xf32, #tpu.memory_space<smem>>
    %589 = vector.broadcast %588 : f32 to vector<8x16xf32>
    %590 = arith.mulf %574, %589 : vector<8x16xf32>
    %591 = arith.addf %583, %590 : vector<8x16xf32>
    %c52_150 = arith.constant 52 : index
    %592 = memref.load %arg1[%c52_150] : memref<72xf32, #tpu.memory_space<smem>>
    %593 = vector.broadcast %592 : f32 to vector<8x16xf32>
    %594 = arith.mulf %574, %593 : vector<8x16xf32>
    %595 = arith.addf %587, %594 : vector<8x16xf32>
    %c17_151 = arith.constant 17 : index
    %596 = memref.load %arg1[%c17_151] : memref<72xf32, #tpu.memory_space<smem>>
    %597 = vector.broadcast %596 : f32 to vector<8x16xf32>
    %598 = arith.mulf %579, %597 : vector<8x16xf32>
    %599 = arith.addf %591, %598 : vector<8x16xf32>
    %c53_152 = arith.constant 53 : index
    %600 = memref.load %arg1[%c53_152] : memref<72xf32, #tpu.memory_space<smem>>
    %601 = vector.broadcast %600 : f32 to vector<8x16xf32>
    %602 = arith.mulf %579, %601 : vector<8x16xf32>
    %603 = arith.addf %595, %602 : vector<8x16xf32>
    %c0_153 = arith.constant 0 : index
    %c2_154 = arith.constant 2 : index
    %c7_155 = arith.constant 7 : index
    %c0_156 = arith.constant 0 : index
    %604 = vector.load %arg3[%c0_153, %c2_154, %c7_155, %c0_156] : memref<1x4x16x16xf32, #tpu.memory_space<vmem>>, vector<1x1x8x16xf32>
    %605 = vector.shape_cast %604 : vector<1x1x8x16xf32> to vector<8x16xf32>
    %cst_157 = arith.constant 0.000000e+00 : f32
    %606 = vector.broadcast %cst_157 : f32 to vector<8x1xf32>
    %607 = vector.extract_strided_slice %605 {offsets = [0, 0], sizes = [8, 15], strides = [1, 1]} : vector<8x16xf32> to vector<8x15xf32>
    %608 = tpu.concatenate %606, %607 in 1 : vector<8x1xf32>, vector<8x15xf32> -> vector<8x16xf32>
    %609 = vector.extract_strided_slice %605 {offsets = [0, 1], sizes = [8, 15], strides = [1, 1]} : vector<8x16xf32> to vector<8x15xf32>
    %610 = tpu.concatenate %609, %606 in 1 : vector<8x15xf32>, vector<8x1xf32> -> vector<8x16xf32>
    %c18_158 = arith.constant 18 : index
    %611 = memref.load %arg1[%c18_158] : memref<72xf32, #tpu.memory_space<smem>>
    %612 = vector.broadcast %611 : f32 to vector<8x16xf32>
    %613 = arith.mulf %608, %612 : vector<8x16xf32>
    %614 = arith.addf %599, %613 : vector<8x16xf32>
    %c54_159 = arith.constant 54 : index
    %615 = memref.load %arg1[%c54_159] : memref<72xf32, #tpu.memory_space<smem>>
    %616 = vector.broadcast %615 : f32 to vector<8x16xf32>
    %617 = arith.mulf %608, %616 : vector<8x16xf32>
    %618 = arith.addf %603, %617 : vector<8x16xf32>
    %c19_160 = arith.constant 19 : index
    %619 = memref.load %arg1[%c19_160] : memref<72xf32, #tpu.memory_space<smem>>
    %620 = vector.broadcast %619 : f32 to vector<8x16xf32>
    %621 = arith.mulf %605, %620 : vector<8x16xf32>
    %622 = arith.addf %614, %621 : vector<8x16xf32>
    %c55_161 = arith.constant 55 : index
    %623 = memref.load %arg1[%c55_161] : memref<72xf32, #tpu.memory_space<smem>>
    %624 = vector.broadcast %623 : f32 to vector<8x16xf32>
    %625 = arith.mulf %605, %624 : vector<8x16xf32>
    %626 = arith.addf %618, %625 : vector<8x16xf32>
    %c20_162 = arith.constant 20 : index
    %627 = memref.load %arg1[%c20_162] : memref<72xf32, #tpu.memory_space<smem>>
    %628 = vector.broadcast %627 : f32 to vector<8x16xf32>
    %629 = arith.mulf %610, %628 : vector<8x16xf32>
    %630 = arith.addf %622, %629 : vector<8x16xf32>
    %c56_163 = arith.constant 56 : index
    %631 = memref.load %arg1[%c56_163] : memref<72xf32, #tpu.memory_space<smem>>
    %632 = vector.broadcast %631 : f32 to vector<8x16xf32>
    %633 = arith.mulf %610, %632 : vector<8x16xf32>
    %634 = arith.addf %626, %633 : vector<8x16xf32>
    %c0_164 = arith.constant 0 : index
    %c2_165 = arith.constant 2 : index
    %c8_166 = arith.constant 8 : index
    %c0_167 = arith.constant 0 : index
    %635 = vector.load %arg3[%c0_164, %c2_165, %c8_166, %c0_167] : memref<1x4x16x16xf32, #tpu.memory_space<vmem>>, vector<1x1x8x16xf32>
    %636 = vector.shape_cast %635 : vector<1x1x8x16xf32> to vector<8x16xf32>
    %cst_168 = arith.constant 0.000000e+00 : f32
    %637 = vector.broadcast %cst_168 : f32 to vector<8x1xf32>
    %638 = vector.extract_strided_slice %636 {offsets = [0, 0], sizes = [8, 15], strides = [1, 1]} : vector<8x16xf32> to vector<8x15xf32>
    %639 = tpu.concatenate %637, %638 in 1 : vector<8x1xf32>, vector<8x15xf32> -> vector<8x16xf32>
    %640 = vector.extract_strided_slice %636 {offsets = [0, 1], sizes = [8, 15], strides = [1, 1]} : vector<8x16xf32> to vector<8x15xf32>
    %641 = tpu.concatenate %640, %637 in 1 : vector<8x15xf32>, vector<8x1xf32> -> vector<8x16xf32>
    %c21_169 = arith.constant 21 : index
    %642 = memref.load %arg1[%c21_169] : memref<72xf32, #tpu.memory_space<smem>>
    %643 = vector.broadcast %642 : f32 to vector<8x16xf32>
    %644 = arith.mulf %639, %643 : vector<8x16xf32>
    %645 = arith.addf %630, %644 : vector<8x16xf32>
    %c57_170 = arith.constant 57 : index
    %646 = memref.load %arg1[%c57_170] : memref<72xf32, #tpu.memory_space<smem>>
    %647 = vector.broadcast %646 : f32 to vector<8x16xf32>
    %648 = arith.mulf %639, %647 : vector<8x16xf32>
    %649 = arith.addf %634, %648 : vector<8x16xf32>
    %c22_171 = arith.constant 22 : index
    %650 = memref.load %arg1[%c22_171] : memref<72xf32, #tpu.memory_space<smem>>
    %651 = vector.broadcast %650 : f32 to vector<8x16xf32>
    %652 = arith.mulf %636, %651 : vector<8x16xf32>
    %653 = arith.addf %645, %652 : vector<8x16xf32>
    %c58_172 = arith.constant 58 : index
    %654 = memref.load %arg1[%c58_172] : memref<72xf32, #tpu.memory_space<smem>>
    %655 = vector.broadcast %654 : f32 to vector<8x16xf32>
    %656 = arith.mulf %636, %655 : vector<8x16xf32>
    %657 = arith.addf %649, %656 : vector<8x16xf32>
    %c23_173 = arith.constant 23 : index
    %658 = memref.load %arg1[%c23_173] : memref<72xf32, #tpu.memory_space<smem>>
    %659 = vector.broadcast %658 : f32 to vector<8x16xf32>
    %660 = arith.mulf %641, %659 : vector<8x16xf32>
    %661 = arith.addf %653, %660 : vector<8x16xf32>
    %c59_174 = arith.constant 59 : index
    %662 = memref.load %arg1[%c59_174] : memref<72xf32, #tpu.memory_space<smem>>
    %663 = vector.broadcast %662 : f32 to vector<8x16xf32>
    %664 = arith.mulf %641, %663 : vector<8x16xf32>
    %665 = arith.addf %657, %664 : vector<8x16xf32>
    %c0_175 = arith.constant 0 : index
    %c2_176 = arith.constant 2 : index
    %c9_177 = arith.constant 9 : index
    %c0_178 = arith.constant 0 : index
    %666 = vector.load %arg3[%c0_175, %c2_176, %c9_177, %c0_178] : memref<1x4x16x16xf32, #tpu.memory_space<vmem>>, vector<1x1x7x16xf32>
    %667 = vector.shape_cast %666 : vector<1x1x7x16xf32> to vector<7x16xf32>
    %cst_179 = arith.constant 0.000000e+00 : f32
    %668 = vector.broadcast %cst_179 : f32 to vector<1x16xf32>
    %669 = tpu.concatenate %667, %668 in 0 : vector<7x16xf32>, vector<1x16xf32> -> vector<8x16xf32>
    %cst_180 = arith.constant 0.000000e+00 : f32
    %670 = vector.broadcast %cst_180 : f32 to vector<8x1xf32>
    %671 = vector.extract_strided_slice %669 {offsets = [0, 0], sizes = [8, 15], strides = [1, 1]} : vector<8x16xf32> to vector<8x15xf32>
    %672 = tpu.concatenate %670, %671 in 1 : vector<8x1xf32>, vector<8x15xf32> -> vector<8x16xf32>
    %673 = vector.extract_strided_slice %669 {offsets = [0, 1], sizes = [8, 15], strides = [1, 1]} : vector<8x16xf32> to vector<8x15xf32>
    %674 = tpu.concatenate %673, %670 in 1 : vector<8x15xf32>, vector<8x1xf32> -> vector<8x16xf32>
    %c24_181 = arith.constant 24 : index
    %675 = memref.load %arg1[%c24_181] : memref<72xf32, #tpu.memory_space<smem>>
    %676 = vector.broadcast %675 : f32 to vector<8x16xf32>
    %677 = arith.mulf %672, %676 : vector<8x16xf32>
    %678 = arith.addf %661, %677 : vector<8x16xf32>
    %c60_182 = arith.constant 60 : index
    %679 = memref.load %arg1[%c60_182] : memref<72xf32, #tpu.memory_space<smem>>
    %680 = vector.broadcast %679 : f32 to vector<8x16xf32>
    %681 = arith.mulf %672, %680 : vector<8x16xf32>
    %682 = arith.addf %665, %681 : vector<8x16xf32>
    %c25_183 = arith.constant 25 : index
    %683 = memref.load %arg1[%c25_183] : memref<72xf32, #tpu.memory_space<smem>>
    %684 = vector.broadcast %683 : f32 to vector<8x16xf32>
    %685 = arith.mulf %669, %684 : vector<8x16xf32>
    %686 = arith.addf %678, %685 : vector<8x16xf32>
    %c61_184 = arith.constant 61 : index
    %687 = memref.load %arg1[%c61_184] : memref<72xf32, #tpu.memory_space<smem>>
    %688 = vector.broadcast %687 : f32 to vector<8x16xf32>
    %689 = arith.mulf %669, %688 : vector<8x16xf32>
    %690 = arith.addf %682, %689 : vector<8x16xf32>
    %c26_185 = arith.constant 26 : index
    %691 = memref.load %arg1[%c26_185] : memref<72xf32, #tpu.memory_space<smem>>
    %692 = vector.broadcast %691 : f32 to vector<8x16xf32>
    %693 = arith.mulf %674, %692 : vector<8x16xf32>
    %694 = arith.addf %686, %693 : vector<8x16xf32>
    %c62_186 = arith.constant 62 : index
    %695 = memref.load %arg1[%c62_186] : memref<72xf32, #tpu.memory_space<smem>>
    %696 = vector.broadcast %695 : f32 to vector<8x16xf32>
    %697 = arith.mulf %674, %696 : vector<8x16xf32>
    %698 = arith.addf %690, %697 : vector<8x16xf32>
    %c0_187 = arith.constant 0 : index
    %c3_188 = arith.constant 3 : index
    %c7_189 = arith.constant 7 : index
    %c0_190 = arith.constant 0 : index
    %699 = vector.load %arg3[%c0_187, %c3_188, %c7_189, %c0_190] : memref<1x4x16x16xf32, #tpu.memory_space<vmem>>, vector<1x1x8x16xf32>
    %700 = vector.shape_cast %699 : vector<1x1x8x16xf32> to vector<8x16xf32>
    %cst_191 = arith.constant 0.000000e+00 : f32
    %701 = vector.broadcast %cst_191 : f32 to vector<8x1xf32>
    %702 = vector.extract_strided_slice %700 {offsets = [0, 0], sizes = [8, 15], strides = [1, 1]} : vector<8x16xf32> to vector<8x15xf32>
    %703 = tpu.concatenate %701, %702 in 1 : vector<8x1xf32>, vector<8x15xf32> -> vector<8x16xf32>
    %704 = vector.extract_strided_slice %700 {offsets = [0, 1], sizes = [8, 15], strides = [1, 1]} : vector<8x16xf32> to vector<8x15xf32>
    %705 = tpu.concatenate %704, %701 in 1 : vector<8x15xf32>, vector<8x1xf32> -> vector<8x16xf32>
    %c27_192 = arith.constant 27 : index
    %706 = memref.load %arg1[%c27_192] : memref<72xf32, #tpu.memory_space<smem>>
    %707 = vector.broadcast %706 : f32 to vector<8x16xf32>
    %708 = arith.mulf %703, %707 : vector<8x16xf32>
    %709 = arith.addf %694, %708 : vector<8x16xf32>
    %c63_193 = arith.constant 63 : index
    %710 = memref.load %arg1[%c63_193] : memref<72xf32, #tpu.memory_space<smem>>
    %711 = vector.broadcast %710 : f32 to vector<8x16xf32>
    %712 = arith.mulf %703, %711 : vector<8x16xf32>
    %713 = arith.addf %698, %712 : vector<8x16xf32>
    %c28_194 = arith.constant 28 : index
    %714 = memref.load %arg1[%c28_194] : memref<72xf32, #tpu.memory_space<smem>>
    %715 = vector.broadcast %714 : f32 to vector<8x16xf32>
    %716 = arith.mulf %700, %715 : vector<8x16xf32>
    %717 = arith.addf %709, %716 : vector<8x16xf32>
    %c64_195 = arith.constant 64 : index
    %718 = memref.load %arg1[%c64_195] : memref<72xf32, #tpu.memory_space<smem>>
    %719 = vector.broadcast %718 : f32 to vector<8x16xf32>
    %720 = arith.mulf %700, %719 : vector<8x16xf32>
    %721 = arith.addf %713, %720 : vector<8x16xf32>
    %c29_196 = arith.constant 29 : index
    %722 = memref.load %arg1[%c29_196] : memref<72xf32, #tpu.memory_space<smem>>
    %723 = vector.broadcast %722 : f32 to vector<8x16xf32>
    %724 = arith.mulf %705, %723 : vector<8x16xf32>
    %725 = arith.addf %717, %724 : vector<8x16xf32>
    %c65_197 = arith.constant 65 : index
    %726 = memref.load %arg1[%c65_197] : memref<72xf32, #tpu.memory_space<smem>>
    %727 = vector.broadcast %726 : f32 to vector<8x16xf32>
    %728 = arith.mulf %705, %727 : vector<8x16xf32>
    %729 = arith.addf %721, %728 : vector<8x16xf32>
    %c0_198 = arith.constant 0 : index
    %c3_199 = arith.constant 3 : index
    %c8_200 = arith.constant 8 : index
    %c0_201 = arith.constant 0 : index
    %730 = vector.load %arg3[%c0_198, %c3_199, %c8_200, %c0_201] : memref<1x4x16x16xf32, #tpu.memory_space<vmem>>, vector<1x1x8x16xf32>
    %731 = vector.shape_cast %730 : vector<1x1x8x16xf32> to vector<8x16xf32>
    %cst_202 = arith.constant 0.000000e+00 : f32
    %732 = vector.broadcast %cst_202 : f32 to vector<8x1xf32>
    %733 = vector.extract_strided_slice %731 {offsets = [0, 0], sizes = [8, 15], strides = [1, 1]} : vector<8x16xf32> to vector<8x15xf32>
    %734 = tpu.concatenate %732, %733 in 1 : vector<8x1xf32>, vector<8x15xf32> -> vector<8x16xf32>
    %735 = vector.extract_strided_slice %731 {offsets = [0, 1], sizes = [8, 15], strides = [1, 1]} : vector<8x16xf32> to vector<8x15xf32>
    %736 = tpu.concatenate %735, %732 in 1 : vector<8x15xf32>, vector<8x1xf32> -> vector<8x16xf32>
    %c30_203 = arith.constant 30 : index
    %737 = memref.load %arg1[%c30_203] : memref<72xf32, #tpu.memory_space<smem>>
    %738 = vector.broadcast %737 : f32 to vector<8x16xf32>
    %739 = arith.mulf %734, %738 : vector<8x16xf32>
    %740 = arith.addf %725, %739 : vector<8x16xf32>
    %c66_204 = arith.constant 66 : index
    %741 = memref.load %arg1[%c66_204] : memref<72xf32, #tpu.memory_space<smem>>
    %742 = vector.broadcast %741 : f32 to vector<8x16xf32>
    %743 = arith.mulf %734, %742 : vector<8x16xf32>
    %744 = arith.addf %729, %743 : vector<8x16xf32>
    %c31_205 = arith.constant 31 : index
    %745 = memref.load %arg1[%c31_205] : memref<72xf32, #tpu.memory_space<smem>>
    %746 = vector.broadcast %745 : f32 to vector<8x16xf32>
    %747 = arith.mulf %731, %746 : vector<8x16xf32>
    %748 = arith.addf %740, %747 : vector<8x16xf32>
    %c67_206 = arith.constant 67 : index
    %749 = memref.load %arg1[%c67_206] : memref<72xf32, #tpu.memory_space<smem>>
    %750 = vector.broadcast %749 : f32 to vector<8x16xf32>
    %751 = arith.mulf %731, %750 : vector<8x16xf32>
    %752 = arith.addf %744, %751 : vector<8x16xf32>
    %c32_207 = arith.constant 32 : index
    %753 = memref.load %arg1[%c32_207] : memref<72xf32, #tpu.memory_space<smem>>
    %754 = vector.broadcast %753 : f32 to vector<8x16xf32>
    %755 = arith.mulf %736, %754 : vector<8x16xf32>
    %756 = arith.addf %748, %755 : vector<8x16xf32>
    %c68_208 = arith.constant 68 : index
    %757 = memref.load %arg1[%c68_208] : memref<72xf32, #tpu.memory_space<smem>>
    %758 = vector.broadcast %757 : f32 to vector<8x16xf32>
    %759 = arith.mulf %736, %758 : vector<8x16xf32>
    %760 = arith.addf %752, %759 : vector<8x16xf32>
    %c0_209 = arith.constant 0 : index
    %c3_210 = arith.constant 3 : index
    %c9_211 = arith.constant 9 : index
    %c0_212 = arith.constant 0 : index
    %761 = vector.load %arg3[%c0_209, %c3_210, %c9_211, %c0_212] : memref<1x4x16x16xf32, #tpu.memory_space<vmem>>, vector<1x1x7x16xf32>
    %762 = vector.shape_cast %761 : vector<1x1x7x16xf32> to vector<7x16xf32>
    %cst_213 = arith.constant 0.000000e+00 : f32
    %763 = vector.broadcast %cst_213 : f32 to vector<1x16xf32>
    %764 = tpu.concatenate %762, %763 in 0 : vector<7x16xf32>, vector<1x16xf32> -> vector<8x16xf32>
    %cst_214 = arith.constant 0.000000e+00 : f32
    %765 = vector.broadcast %cst_214 : f32 to vector<8x1xf32>
    %766 = vector.extract_strided_slice %764 {offsets = [0, 0], sizes = [8, 15], strides = [1, 1]} : vector<8x16xf32> to vector<8x15xf32>
    %767 = tpu.concatenate %765, %766 in 1 : vector<8x1xf32>, vector<8x15xf32> -> vector<8x16xf32>
    %768 = vector.extract_strided_slice %764 {offsets = [0, 1], sizes = [8, 15], strides = [1, 1]} : vector<8x16xf32> to vector<8x15xf32>
    %769 = tpu.concatenate %768, %765 in 1 : vector<8x15xf32>, vector<8x1xf32> -> vector<8x16xf32>
    %c33_215 = arith.constant 33 : index
    %770 = memref.load %arg1[%c33_215] : memref<72xf32, #tpu.memory_space<smem>>
    %771 = vector.broadcast %770 : f32 to vector<8x16xf32>
    %772 = arith.mulf %767, %771 : vector<8x16xf32>
    %773 = arith.addf %756, %772 : vector<8x16xf32>
    %c69_216 = arith.constant 69 : index
    %774 = memref.load %arg1[%c69_216] : memref<72xf32, #tpu.memory_space<smem>>
    %775 = vector.broadcast %774 : f32 to vector<8x16xf32>
    %776 = arith.mulf %767, %775 : vector<8x16xf32>
    %777 = arith.addf %760, %776 : vector<8x16xf32>
    %c34_217 = arith.constant 34 : index
    %778 = memref.load %arg1[%c34_217] : memref<72xf32, #tpu.memory_space<smem>>
    %779 = vector.broadcast %778 : f32 to vector<8x16xf32>
    %780 = arith.mulf %764, %779 : vector<8x16xf32>
    %781 = arith.addf %773, %780 : vector<8x16xf32>
    %c70_218 = arith.constant 70 : index
    %782 = memref.load %arg1[%c70_218] : memref<72xf32, #tpu.memory_space<smem>>
    %783 = vector.broadcast %782 : f32 to vector<8x16xf32>
    %784 = arith.mulf %764, %783 : vector<8x16xf32>
    %785 = arith.addf %777, %784 : vector<8x16xf32>
    %c35_219 = arith.constant 35 : index
    %786 = memref.load %arg1[%c35_219] : memref<72xf32, #tpu.memory_space<smem>>
    %787 = vector.broadcast %786 : f32 to vector<8x16xf32>
    %788 = arith.mulf %769, %787 : vector<8x16xf32>
    %789 = arith.addf %781, %788 : vector<8x16xf32>
    %c71_220 = arith.constant 71 : index
    %790 = memref.load %arg1[%c71_220] : memref<72xf32, #tpu.memory_space<smem>>
    %791 = vector.broadcast %790 : f32 to vector<8x16xf32>
    %792 = arith.mulf %769, %791 : vector<8x16xf32>
    %793 = arith.addf %785, %792 : vector<8x16xf32>
    %c0_221 = arith.constant 0 : index
    %794 = memref.load %arg2[%c0_221] : memref<2xf32, #tpu.memory_space<smem>>
    %795 = vector.broadcast %794 : f32 to vector<8x16xf32>
    %796 = arith.addf %789, %795 : vector<8x16xf32>
    %c0_222 = arith.constant 0 : index
    %c0_223 = arith.constant 0 : index
    %c8_224 = arith.constant 8 : index
    %c0_225 = arith.constant 0 : index
    %797 = vector.load %arg4[%c0_222, %c0_223, %c8_224, %c0_225] : memref<1x2x16x16xf32, #tpu.memory_space<vmem>>, vector<1x1x8x16xf32>
    %798 = vector.shape_cast %797 : vector<1x1x8x16xf32> to vector<8x16xf32>
    %799 = vector.shape_cast %796 : vector<8x16xf32> to vector<1x1x8x16xf32>
    tpu.vector_store %arg4[%c0_222, %c0_223, %c8_224, %c0_225], %799 {strides = array<i32>} : memref<1x2x16x16xf32, #tpu.memory_space<vmem>>, vector<1x1x8x16xf32>,
    %cst_226 = arith.constant dense<0.000000e+00> : vector<16xf32>
    %800 = vector.multi_reduction <add>, %789, %cst_226 [0] : vector<8x16xf32> to vector<16xf32>
    %801 = vector.shape_cast %800 : vector<16xf32> to vector<1x16xf32>
    %802 = arith.addf %394, %801 : vector<1x16xf32>
    %803 = arith.mulf %789, %789 : vector<8x16xf32>
    %cst_227 = arith.constant dense<0.000000e+00> : vector<16xf32>
    %804 = vector.multi_reduction <add>, %803, %cst_227 [0] : vector<8x16xf32> to vector<16xf32>
    %805 = vector.shape_cast %804 : vector<16xf32> to vector<1x16xf32>
    %806 = arith.addf %398, %805 : vector<1x16xf32>
    %c1_228 = arith.constant 1 : index
    %807 = memref.load %arg2[%c1_228] : memref<2xf32, #tpu.memory_space<smem>>
    %808 = vector.broadcast %807 : f32 to vector<8x16xf32>
    %809 = arith.addf %793, %808 : vector<8x16xf32>
    %c0_229 = arith.constant 0 : index
    %c1_230 = arith.constant 1 : index
    %c8_231 = arith.constant 8 : index
    %c0_232 = arith.constant 0 : index
    %810 = vector.load %arg4[%c0_229, %c1_230, %c8_231, %c0_232] : memref<1x2x16x16xf32, #tpu.memory_space<vmem>>, vector<1x1x8x16xf32>
    %811 = vector.shape_cast %810 : vector<1x1x8x16xf32> to vector<8x16xf32>
    %812 = vector.shape_cast %809 : vector<8x16xf32> to vector<1x1x8x16xf32>
    tpu.vector_store %arg4[%c0_229, %c1_230, %c8_231, %c0_232], %812 {strides = array<i32>} : memref<1x2x16x16xf32, #tpu.memory_space<vmem>>, vector<1x1x8x16xf32>,
    %cst_233 = arith.constant dense<0.000000e+00> : vector<16xf32>
    %813 = vector.multi_reduction <add>, %793, %cst_233 [0] : vector<8x16xf32> to vector<16xf32>
    %814 = vector.shape_cast %813 : vector<16xf32> to vector<1x16xf32>
    %815 = arith.addf %407, %814 : vector<1x16xf32>
    %816 = arith.mulf %793, %793 : vector<8x16xf32>
    %cst_234 = arith.constant dense<0.000000e+00> : vector<16xf32>
    %817 = vector.multi_reduction <add>, %816, %cst_234 [0] : vector<8x16xf32> to vector<16xf32>
    %818 = vector.shape_cast %817 : vector<16xf32> to vector<1x16xf32>
    %819 = arith.addf %411, %818 : vector<1x16xf32>
    %c0_235 = arith.constant 0 : index
    %c0_236 = arith.constant 0 : index
    %c0_237 = arith.constant 0 : index
    %820 = vector.load %arg5[%c0_235, %c0_236, %c0_237] : memref<1x4x16xf32, #tpu.memory_space<vmem>>, vector<1x1x16xf32>
    %821 = vector.shape_cast %820 : vector<1x1x16xf32> to vector<1x16xf32>
    %822 = vector.shape_cast %802 : vector<1x16xf32> to vector<1x1x16xf32>
    tpu.vector_store %arg5[%c0_235, %c0_236, %c0_237], %822 {strides = array<i32>} : memref<1x4x16xf32, #tpu.memory_space<vmem>>, vector<1x1x16xf32>,
    %c0_238 = arith.constant 0 : index
    %c2_239 = arith.constant 2 : index
    %c0_240 = arith.constant 0 : index
    %823 = vector.load %arg5[%c0_238, %c2_239, %c0_240] : memref<1x4x16xf32, #tpu.memory_space<vmem>>, vector<1x1x16xf32>
    %824 = vector.shape_cast %823 : vector<1x1x16xf32> to vector<1x16xf32>
    %825 = vector.shape_cast %806 : vector<1x16xf32> to vector<1x1x16xf32>
    tpu.vector_store %arg5[%c0_238, %c2_239, %c0_240], %825 {strides = array<i32>} : memref<1x4x16xf32, #tpu.memory_space<vmem>>, vector<1x1x16xf32>,
    %c0_241 = arith.constant 0 : index
    %c1_242 = arith.constant 1 : index
    %c0_243 = arith.constant 0 : index
    %826 = vector.load %arg5[%c0_241, %c1_242, %c0_243] : memref<1x4x16xf32, #tpu.memory_space<vmem>>, vector<1x1x16xf32>
    %827 = vector.shape_cast %826 : vector<1x1x16xf32> to vector<1x16xf32>
    %828 = vector.shape_cast %815 : vector<1x16xf32> to vector<1x1x16xf32>
    tpu.vector_store %arg5[%c0_241, %c1_242, %c0_243], %828 {strides = array<i32>} : memref<1x4x16xf32, #tpu.memory_space<vmem>>, vector<1x1x16xf32>,
    %c0_244 = arith.constant 0 : index
    %c3_245 = arith.constant 3 : index
    %c0_246 = arith.constant 0 : index
    %829 = vector.load %arg5[%c0_244, %c3_245, %c0_246] : memref<1x4x16xf32, #tpu.memory_space<vmem>>, vector<1x1x16xf32>
    %830 = vector.shape_cast %829 : vector<1x1x16xf32> to vector<1x16xf32>
    %831 = vector.shape_cast %819 : vector<1x16xf32> to vector<1x1x16xf32>
    tpu.vector_store %arg5[%c0_244, %c3_245, %c0_246], %831 {strides = array<i32>} : memref<1x4x16xf32, #tpu.memory_space<vmem>>, vector<1x1x16xf32>,
    return
  }
  func.func @transform_0(%arg0: i32) -> i32 {
    %c0_i32 = arith.constant 0 : i32
    %c0_i32_0 = arith.constant 0 : i32
    return %c0_i32 : i32
  }
  func.func @transform_1(%arg0: i32) -> i32 {
    %c0_i32 = arith.constant 0 : i32
    %c0_i32_0 = arith.constant 0 : i32
    return %c0_i32 : i32
  }
  func.func @transform_2(%arg0: i32) -> (i32, i32, i32, i32) {
    %c0_i32 = arith.constant 0 : i32
    %c0_i32_0 = arith.constant 0 : i32
    %c0_i32_1 = arith.constant 0 : i32
    %c0_i32_2 = arith.constant 0 : i32
    return %arg0, %c0_i32, %c0_i32_0, %c0_i32_1 : i32, i32, i32, i32
  }
  func.func @transform_3(%arg0: i32) -> (i32, i32, i32, i32) {
    %c0_i32 = arith.constant 0 : i32
    %c0_i32_0 = arith.constant 0 : i32
    %c0_i32_1 = arith.constant 0 : i32
    %c0_i32_2 = arith.constant 0 : i32
    return %arg0, %c0_i32, %c0_i32_0, %c0_i32_1 : i32, i32, i32, i32
  }
  func.func @transform_4(%arg0: i32) -> (i32, i32, i32) {
    %c0_i32 = arith.constant 0 : i32
    %c0_i32_0 = arith.constant 0 : i32
    %c0_i32_1 = arith.constant 0 : i32
    return %arg0, %c0_i32, %c0_i32_0 : i32, i32, i32
  }
}

</mosaic_0001>

<llo_original>
// kernel: get_disp_forward.1
$region0: #{get_disp_forward.1}
  #allocation0 [shape = 'u32[]', space=smem, size = 0x4, offset = 0x4, fixed_abs, tag = 'smem constant byte address 0x4 - core index']
  #allocation1 [shape = 'u32[144,128]{1,0:T(1,128)}', space=vmem, size = 0x12000, scoped, tag = 'internal scratch']
  %s0 = inlined_call_operand.vmem [shape: f32[72], index: 0, kind: input, shape index: {}]
  %s1 = inlined_call_operand.vmem [shape: f32[2], index: 1, kind: input, shape index: {}]
  %s2 = inlined_call_operand.hbm [shape: f32[2,4,16,16], index: 2, kind: input, shape index: {}]
  %s3 = inlined_call_operand.vmem [shape: f32[2,2,16,16], index: 3, kind: output, shape index: {0}]
  %s4 = inlined_call_operand.vmem [shape: f32[2,4,16], index: 4, kind: output, shape index: {1}]
  %5 = xla_tuple %s3, %s4
  %s6 = sld [smem:[#allocation0]]
  $region65: #{get_disp_forward.1} parent=0
    _
  %s8 = ssub.s32 1, %s6
  %s9 = scalar_select 0, %s8, %s6
  $region1: #{get_disp_forward.1} parent=0
    #allocation2 [shape = 'u8[512]{0}', space=smem, size = 0x200, scoped, tag = 'input window, operand 0, single buffered']
    #allocation3 [shape = 's32[2]{0}', space=sflag, size = 0x8, scoped, tag = 'scoped memory for get_disp_forward.1']
    #allocation4 [shape = 's32[2]{0}', space=sflag, size = 0x8, scoped, tag = 'scoped memory for get_disp_forward.1']
    #allocation5 [shape = 'u8[512]{0}', space=smem, size = 0x200, scoped, tag = 'input window, operand 1, single buffered']
    #allocation6 [shape = 's32[1]{0}', space=sflag, size = 0x4, scoped, tag = 'scoped memory for get_disp_forward.1']
    #allocation7 [shape = 'u8[65536]{0}', space=vmem, size = 0x10000, scoped, tag = 'input window, operand 2']
    %10 = vsyncpa [#allocation4], 0
    %11 = vsyncpa [#allocation6], 0
    %12 = vsyncpa [#allocation3], 0
    %s13 = scalar_lea.sflag [#allocation3], 1
    %14 = vsyncpa %s13, 0
    loop: start=0, step=1, limit=4
    $region2: #{get_disp_forward.1} parent=1 // loop_pre_header
      _
    $region3: #{get_disp_forward.1} parent=1 // loop_header
      %s16 = sphi 0, %s20
      %p17 = scmp.ge.s32.totalorder %s16, 4
      %s24 = sphi 0, %s24
      %s26 = sphi 0, %s24
      %s27 = sphi 0, %s26
      %s41 = sphi 0, %s27
      %s45 = sphi 0, %s45
      %s47 = sphi 0, %s45
      %s48 = sphi 0, %s47
      %s62 = sphi 0, %s48
      %s68 = sphi 0, %s70
      %s71 = sphi 0, %s68
      %s72 = sphi 0, %s71
      %s88 = sphi 0, %s72
      %s94 = sphi 0, %s96
      %s97 = sphi 0, %s94
      %s98 = sphi 0, %s97
      %s114 = sphi 0, %s98
      %s120 = sphi 0, %s122
      %s123 = sphi 0, %s120
      %s124 = sphi 0, %s123
      %s140 = sphi 0, %s124
    $region4: #{get_disp_forward.1} parent=1 // loop_header_branch
      %19 = sbr.rel (%p17) target = $region8
    $region5: #{get_disp_forward.1} parent=1 // loop_body
      %s21 = ssub.s32 %s16, 1
      %s22 = ssub.s32 %s16, 2
      %s23 = sadd.s32 %s16, 1
      %s25 = sadd.s32 %s24, 1
      %p28 = scmp.eq.s32.totalorder %s16, 1
      %p29 = scmp.ne.s32.totalorder %s24, %s26
      %p30 = scmp.eq.s32.totalorder %s16, 0
      %p31 = por %p29, %p30
      %p32 = scmp.ne.s32.totalorder %s24, %s26
      %p33 = scmp.eq.s32.totalorder %s21, 1
      %p34 = por %p32, %p33
      %p35 = scmp.ne.s32.totalorder %s26, %s27
      %p36 = scmp.eq.s32.totalorder %s21, 0
      %p37 = por %p35, %p36
      %p38 = scmp.ne.s32.totalorder %s26, %s27
      %p39 = scmp.eq.s32.totalorder %s22, 1
      %p40 = por %p38, %p39
      %p42 = scmp.ne.s32.totalorder %s27, %s41
      %p43 = scmp.eq.s32.totalorder %s22, 0
      %p44 = por %p42, %p43
      %s46 = sadd.s32 %s45, 1
      %p49 = scmp.eq.s32.totalorder %s16, 1
      %p50 = scmp.ne.s32.totalorder %s45, %s47
      %p51 = scmp.eq.s32.totalorder %s16, 0
      %p52 = por %p50, %p51
      %p53 = scmp.ne.s32.totalorder %s45, %s47
      %p54 = scmp.eq.s32.totalorder %s21, 1
      %p55 = por %p53, %p54
      %p56 = scmp.ne.s32.totalorder %s47, %s48
      %p57 = scmp.eq.s32.totalorder %s21, 0
      %p58 = por %p56, %p57
      %p59 = scmp.ne.s32.totalorder %s47, %s48
      %p60 = scmp.eq.s32.totalorder %s22, 1
      %p61 = por %p59, %p60
      %p63 = scmp.ne.s32.totalorder %s48, %s62
      %p64 = scmp.eq.s32.totalorder %s22, 0
      %p65 = por %p63, %p64
      %s66 = ssub.s32 %s16, %s23
      %p67 = scmp.eq.s32.totalorder %s66, 0
      %s69 = sadd.s32 %s68, 1
      %s70 = scalar_select %p67, %s68, %s69
      %p73 = pneg %p67
      %p74 = scmp.eq.s32.totalorder %s16, 1
      %p75 = por %p73, %p74
      %p76 = scmp.ne.s32.totalorder %s68, %s71
      %p77 = scmp.eq.s32.totalorder %s16, 0
      %p78 = por %p76, %p77
      %p79 = scmp.ne.s32.totalorder %s68, %s71
      %p80 = scmp.eq.s32.totalorder %s21, 1
      %p81 = por %p79, %p80
      %p82 = scmp.ne.s32.totalorder %s71, %s72
      %p83 = scmp.eq.s32.totalorder %s21, 0
      %p84 = por %p82, %p83
      %p85 = scmp.ne.s32.totalorder %s71, %s72
      %p86 = scmp.eq.s32.totalorder %s22, 1
      %p87 = por %p85, %p86
      %p89 = scmp.ne.s32.totalorder %s72, %s88
      %p90 = scmp.eq.s32.totalorder %s22, 0
      %p91 = por %p89, %p90
      %s92 = ssub.s32 %s16, %s23
      %p93 = scmp.eq.s32.totalorder %s92, 0
      %s95 = sadd.s32 %s94, 1
      %s96 = scalar_select %p93, %s94, %s95
      %p99 = pneg %p93
      %p100 = scmp.eq.s32.totalorder %s16, 1
      %p101 = por %p99, %p100
      %p102 = scmp.ne.s32.totalorder %s94, %s97
      %p103 = scmp.eq.s32.totalorder %s16, 0
      %p104 = por %p102, %p103
      %p105 = scmp.ne.s32.totalorder %s94, %s97
      %p106 = scmp.eq.s32.totalorder %s21, 1
      %p107 = por %p105, %p106
      %p108 = scmp.ne.s32.totalorder %s97, %s98
      %p109 = scmp.eq.s32.totalorder %s21, 0
      %p110 = por %p108, %p109
      %p111 = scmp.ne.s32.totalorder %s97, %s98
      %p112 = scmp.eq.s32.totalorder %s22, 1
      %p113 = por %p111, %p112
      %p115 = scmp.ne.s32.totalorder %s98, %s114
      %p116 = scmp.eq.s32.totalorder %s22, 0
      %p117 = por %p115, %p116
      %s118 = ssub.s32 %s16, %s23
      %p119 = scmp.eq.s32.totalorder %s118, 0
      %s121 = sadd.s32 %s120, 1
      %s122 = scalar_select %p119, %s120, %s121
      %p125 = pneg %p119
      %p126 = scmp.eq.s32.totalorder %s16, 1
      %p127 = por %p125, %p126
      %p128 = scmp.ne.s32.totalorder %s120, %s123
      %p129 = scmp.eq.s32.totalorder %s16, 0
      %p130 = por %p128, %p129
      %p131 = scmp.ne.s32.totalorder %s120, %s123
      %p132 = scmp.eq.s32.totalorder %s21, 1
      %p133 = por %p131, %p132
      %p134 = scmp.ne.s32.totalorder %s123, %s124
      %p135 = scmp.eq.s32.totalorder %s21, 0
      %p136 = por %p134, %p135
      %p137 = scmp.ne.s32.totalorder %s123, %s124
      %p138 = scmp.eq.s32.totalorder %s22, 1
      %p139 = por %p137, %p138
      %p141 = scmp.ne.s32.totalorder %s124, %s140
      %p142 = scmp.eq.s32.totalorder %s22, 0
      %p143 = por %p141, %p142
      %p144 = scmp.le.s32.totalorder 1, %s16
      %p145 = scmp.lt.s32.totalorder %s16, 3
      %p146 = pnand %p144, %p145
      %p147 = pneg %p146
      // Predicated region
      $region9: #{get_disp_forward.1} parent=5 // pred_check
        _
      $region10: #{get_disp_forward.1} parent=5 // pred_check_branch
        %149 = sbr.rel (%p146) target = $region12
      $region11: #{get_disp_forward.1} parent=5 // pred_region
        %s150 = ssub.s32 %s16, 1
        // Predicated region
        $region13: #{get_disp_forward.1} parent=11 // pred_check
          %p151 = pneg %p37
        $region14: #{get_disp_forward.1} parent=11 // pred_check_branch
          %153 = sbr.rel (%p151) target = $region16
        $region15: #{get_disp_forward.1} parent=11 // pred_region
          %s155 = ssub.s32 16, 16
          %156 = vsyncadd [#allocation4], %s155
          %s158 = sshll.u32 %s0, 4
          %s159 = int_to_ptr.vmem [resolvable:$true] %s158
          %161 = dma.vmem_to_smem %s159, 16, [#allocation2], [#allocation4]
        $region16: #{get_disp_forward.1} parent=11 // pred_fallthru
          _
        // Predicated region
        $region17: #{get_disp_forward.1} parent=11 // pred_check
          %p162 = pneg %p58
        $region18: #{get_disp_forward.1} parent=11 // pred_check_branch
          %164 = sbr.rel (%p162) target = $region20
        $region19: #{get_disp_forward.1} parent=11 // pred_region
          %s166 = ssub.s32 16, 16
          %167 = vsyncadd [#allocation6], %s166
          %s169 = sshll.u32 %s1, 4
          %s170 = int_to_ptr.vmem [resolvable:$true] %s169
          %172 = dma.vmem_to_smem %s170, 16, [#allocation5], [#allocation6]
        $region20: #{get_disp_forward.1} parent=11 // pred_fallthru
          _
      $region12: #{get_disp_forward.1} parent=5 // pred_fallthru
        _
      %p173 = scmp.lt.s32.totalorder %s16, 2
      // Predicated region
      $region21: #{get_disp_forward.1} parent=5 // pred_check
        %p174 = pneg %p173
      $region22: #{get_disp_forward.1} parent=5 // pred_check_branch
        %176 = sbr.rel (%p174) target = $region24
      $region23: #{get_disp_forward.1} parent=5 // pred_region
        // Predicated region
        $region25: #{get_disp_forward.1} parent=23 // pred_check
          %p177 = pneg %p78
        $region26: #{get_disp_forward.1} parent=23 // pred_check_branch
          %179 = sbr.rel (%p177) target = $region28
        $region27: #{get_disp_forward.1} parent=23 // pred_region
          %s180 = sand.u32 %s68, 1
          %s181 = scalar_lea.sflag [#allocation3], %s180
          %s182 = sand.u32 %s68, 1
          %s183 = smul.addr %s182, 64
          %s184 = scalar_lea.vmem [#allocation7], %s183
          %s186 = ssub.s32 1024, 1024
          %187 = vsyncadd %s181, %s186
          %s188 = smul.addr %s16, 8
          %s189 = smul.addr %s188, 128
          %s190 = scalar_lea.hbm %s2, %s189
          %s191 = sshll.u32 %s184, 4
          %s192 = int_to_ptr.vmem [resolvable:$true] %s191
          %197 = dma.hbm_to_vmem [thread:$0]  %s190, 1024, %s192, %s181, 128, 128, 8
        $region28: #{get_disp_forward.1} parent=23 // pred_fallthru
          _
      $region24: #{get_disp_forward.1} parent=5 // pred_fallthru
        _
      %p198 = scmp.le.s32.totalorder 1, %s16
      %p199 = scmp.lt.s32.totalorder %s16, 3
      %p200 = pnand %p198, %p199
      %p201 = pneg %p200
      // Predicated region
      $region29: #{get_disp_forward.1} parent=5 // pred_check
        _
      $region30: #{get_disp_forward.1} parent=5 // pred_check_branch
        %203 = sbr.rel (%p200) target = $region32
      $region31: #{get_disp_forward.1} parent=5 // pred_region
        %s204 = ssub.s32 %s16, 1
        // Predicated region
        $region33: #{get_disp_forward.1} parent=31 // pred_check
          %p205 = pneg %p37
        $region34: #{get_disp_forward.1} parent=31 // pred_check_branch
          %207 = sbr.rel (%p205) target = $region36
        $region35: #{get_disp_forward.1} parent=31 // pred_region
          %208 = dma.done [#allocation4], 16
        $region36: #{get_disp_forward.1} parent=31 // pred_fallthru
          _
        // Predicated region
        $region37: #{get_disp_forward.1} parent=31 // pred_check
          %p209 = pneg %p58
        $region38: #{get_disp_forward.1} parent=31 // pred_check_branch
          %211 = sbr.rel (%p209) target = $region40
        $region39: #{get_disp_forward.1} parent=31 // pred_region
          %212 = dma.done [#allocation6], 16
        $region40: #{get_disp_forward.1} parent=31 // pred_fallthru
          _
        %s213 = sand.u32 %s71, 1
        %s214 = scalar_lea.sflag [#allocation3], %s213
        %s215 = sand.u32 %s71, 1
        %s216 = smul.addr %s215, 64
        %s217 = scalar_lea.vmem [#allocation7], %s216
        // Predicated region
        $region41: #{get_disp_forward.1} parent=31 // pred_check
          %p218 = pneg %p84
        $region42: #{get_disp_forward.1} parent=31 // pred_check_branch
          %220 = sbr.rel (%p218) target = $region44
        $region43: #{get_disp_forward.1} parent=31 // pred_region
          %221 = dma.done %s214, 1024
        $region44: #{get_disp_forward.1} parent=31 // pred_fallthru
          _
        %222 = sfence
        %p223 = pneg %p37
        %p224 = pneg %p34
        %p225 = pneg %p58
        %p226 = pneg %p55
        %s227 = sand.u32 %s71, 1
        %s228 = scalar_lea.sflag [#allocation3], %s227
        %s229 = sand.u32 %s71, 1
        %s230 = smul.addr %s229, 64
        %s231 = scalar_lea.vmem [#allocation7], %s230
        %p232 = pneg %p84
        %p233 = pneg %p81
        %p234 = pneg %p110
        %p235 = pneg %p107
        %p236 = scmp.lt.s32.totalorder %s21, 1
        %s237 = scalar_select %p236, %s21, 1
        %s238 = smul.addr %s237, 4
        %s239 = smul.addr %s238, 8
        %s240 = scalar_lea.vmem %s3, %s239
        %p241 = pneg %p136
        %p242 = pneg %p133
        %p243 = scmp.lt.s32.totalorder %s21, 1
        %s244 = scalar_select %p243, %s21, 1
        %s245 = smul.addr %s244, 4
        %s246 = scalar_lea.vmem %s4, %s245
        %p247 = scmp.lt.s32.totalorder %s21, 1
        %s248 = scalar_select %p247, %s21, 1
        %s249 = smul.addr %s248, 4
        %s250 = smul.addr %s249, 8
        %s251 = scalar_lea.vmem %s3, %s250
        %p252 = scmp.lt.s32.totalorder %s21, 1
        %s253 = scalar_select %p252, %s21, 1
        %s254 = smul.addr %s253, 4
        %s255 = scalar_lea.vmem %s4, %s254
        %v256 = vld [vmem:[%s217] sm:$0x7f]
        %v258 = vrot.slane %v256, 7
        %vm260 = vcmask 1040384
        %v261 = vsel %vm260, 0.0, %v258
        %263 = vrot.lane.b32.xlu0 %v261, 1
        %v264 = vpop.permute.xlu0 %263
        %vm266 = vcmask 7168
        %v267 = vsel %vm266, 0.0, %v264
        %268 = vrot.lane.b32.xlu0 %v261, 127
        %v269 = vpop.permute.xlu0 %268
        %vm271 = vcmask 121856
        %v272 = vsel %vm271, %v269, 0.0
        %s273 = sld [smem:[#allocation2]]
        %v274 = vstv %s273
        %v275 = vmul.f32 %v267, %v274
        %v276 = vadd.f32 %v275, 0.0
        %s277 = sld [smem:[#allocation2 + $0x24]]
        %v278 = vstv %s277
        %v279 = vmul.f32 %v267, %v278
        %v280 = vadd.f32 %v279, 0.0
        %s281 = sld [smem:[#allocation2 + $0x1]]
        %v282 = vstv %s281
        %v283 = vmul.f32 %v261, %v282
        %v284 = vadd.f32 %v276, %v283
        %s285 = sld [smem:[#allocation2 + $0x25]]
        %v286 = vstv %s285
        %v287 = vmul.f32 %v261, %v286
        %v288 = vadd.f32 %v280, %v287
        %s289 = sld [smem:[#allocation2 + $0x2]]
        %v290 = vstv %s289
        %v291 = vmul.f32 %v272, %v290
        %v292 = vadd.f32 %v284, %v291
        %s293 = sld [smem:[#allocation2 + $0x26]]
        %v294 = vstv %s293
        %v295 = vmul.f32 %v272, %v294
        %v296 = vadd.f32 %v288, %v295
        %v297 = vld [vmem:[%s217] sm:$0xff]
        %299 = vrot.lane.b32.xlu0 %v297, 1
        %v300 = vpop.permute.xlu0 %299
        %v302 = vsel %vm266, 0.0, %v300
        %303 = vrot.lane.b32.xlu0 %v297, 127
        %v304 = vpop.permute.xlu0 %303
        %v306 = vsel %vm271, %v304, 0.0
        %s307 = sld [smem:[#allocation2 + $0x3]]
        %v308 = vstv %s307
        %v309 = vmul.f32 %v302, %v308
        %v310 = vadd.f32 %v292, %v309
        %s311 = sld [smem:[#allocation2 + $0x27]]
        %v312 = vstv %s311
        %v313 = vmul.f32 %v302, %v312
        %v314 = vadd.f32 %v296, %v313
        %s315 = sld [smem:[#allocation2 + $0x4]]
        %v316 = vstv %s315
        %v317 = vmul.f32 %v297, %v316
        %v318 = vadd.f32 %v310, %v317
        %s319 = sld [smem:[#allocation2 + $0x28]]
        %v320 = vstv %s319
        %v321 = vmul.f32 %v297, %v320
        %v322 = vadd.f32 %v314, %v321
        %s323 = sld [smem:[#allocation2 + $0x5]]
        %v324 = vstv %s323
        %v325 = vmul.f32 %v306, %v324
        %v326 = vadd.f32 %v318, %v325
        %s327 = sld [smem:[#allocation2 + $0x29]]
        %v328 = vstv %s327
        %v329 = vmul.f32 %v306, %v328
        %v330 = vadd.f32 %v322, %v329
        %v331 = vld [vmem:[%s217 + $0x1] sm:$0xff]
        %333 = vrot.lane.b32.xlu0 %v331, 1
        %v334 = vpop.permute.xlu0 %333
        %v336 = vsel %vm266, 0.0, %v334
        %337 = vrot.lane.b32.xlu0 %v331, 127
        %v338 = vpop.permute.xlu0 %337
        %v340 = vsel %vm271, %v338, 0.0
        %s341 = sld [smem:[#allocation2 + $0x6]]
        %v342 = vstv %s341
        %v343 = vmul.f32 %v336, %v342
        %v344 = vadd.f32 %v326, %v343
        %s345 = sld [smem:[#allocation2 + $0x2a]]
        %v346 = vstv %s345
        %v347 = vmul.f32 %v336, %v346
        %v348 = vadd.f32 %v330, %v347
        %s349 = sld [smem:[#allocation2 + $0x7]]
        %v350 = vstv %s349
        %v351 = vmul.f32 %v331, %v350
        %v352 = vadd.f32 %v344, %v351
        %s353 = sld [smem:[#allocation2 + $0x2b]]
        %v354 = vstv %s353
        %v355 = vmul.f32 %v331, %v354
        %v356 = vadd.f32 %v348, %v355
        %s357 = sld [smem:[#allocation2 + $0x8]]
        %v358 = vstv %s357
        %v359 = vmul.f32 %v340, %v358
        %v360 = vadd.f32 %v352, %v359
        %s361 = sld [smem:[#allocation2 + $0x2c]]
        %v362 = vstv %s361
        %v363 = vmul.f32 %v340, %v362
        %v364 = vadd.f32 %v356, %v363
        %s365 = scalar_lea.vmem %s217, 16 [#allocation7]
        %v366 = vld [vmem:[%s365] sm:$0x7f]
        %v368 = vrot.slane %v366, 7
        %v370 = vsel %vm260, 0.0, %v368
        %372 = vrot.lane.b32.xlu0 %v370, 1
        %v373 = vpop.permute.xlu0 %372
        %v375 = vsel %vm266, 0.0, %v373
        %376 = vrot.lane.b32.xlu0 %v370, 127
        %v377 = vpop.permute.xlu0 %376
        %v379 = vsel %vm271, %v377, 0.0
        %s380 = sld [smem:[#allocation2 + $0x9]]
        %v381 = vstv %s380
        %v382 = vmul.f32 %v375, %v381
        %v383 = vadd.f32 %v360, %v382
        %s384 = sld [smem:[#allocation2 + $0x2d]]
        %v385 = vstv %s384
        %v386 = vmul.f32 %v375, %v385
        %v387 = vadd.f32 %v364, %v386
        %s388 = sld [smem:[#allocation2 + $0xa]]
        %v389 = vstv %s388
        %v390 = vmul.f32 %v370, %v389
        %v391 = vadd.f32 %v383, %v390
        %s392 = sld [smem:[#allocation2 + $0x2e]]
        %v393 = vstv %s392
        %v394 = vmul.f32 %v370, %v393
        %v395 = vadd.f32 %v387, %v394
        %s396 = sld [smem:[#allocation2 + $0xb]]
        %v397 = vstv %s396
        %v398 = vmul.f32 %v379, %v397
        %v399 = vadd.f32 %v391, %v398
        %s400 = sld [smem:[#allocation2 + $0x2f]]
        %v401 = vstv %s400
        %v402 = vmul.f32 %v379, %v401
        %v403 = vadd.f32 %v395, %v402
        %v404 = vld [vmem:[%s365] sm:$0xff]
        %406 = vrot.lane.b32.xlu0 %v404, 1
        %v407 = vpop.permute.xlu0 %406
        %v409 = vsel %vm266, 0.0, %v407
        %410 = vrot.lane.b32.xlu0 %v404, 127
        %v411 = vpop.permute.xlu0 %410
        %v413 = vsel %vm271, %v411, 0.0
        %s414 = sld [smem:[#allocation2 + $0xc]]
        %v415 = vstv %s414
        %v416 = vmul.f32 %v409, %v415
        %v417 = vadd.f32 %v399, %v416
        %s418 = sld [smem:[#allocation2 + $0x30]]
        %v419 = vstv %s418
        %v420 = vmul.f32 %v409, %v419
        %v421 = vadd.f32 %v403, %v420
        %s422 = sld [smem:[#allocation2 + $0xd]]
        %v423 = vstv %s422
        %v424 = vmul.f32 %v404, %v423
        %v425 = vadd.f32 %v417, %v424
        %s426 = sld [smem:[#allocation2 + $0x31]]
        %v427 = vstv %s426
        %v428 = vmul.f32 %v404, %v427
        %v429 = vadd.f32 %v421, %v428
        %s430 = sld [smem:[#allocation2 + $0xe]]
        %v431 = vstv %s430
        %v432 = vmul.f32 %v413, %v431
        %v433 = vadd.f32 %v425, %v432
        %s434 = sld [smem:[#allocation2 + $0x32]]
        %v435 = vstv %s434
        %v436 = vmul.f32 %v413, %v435
        %v437 = vadd.f32 %v429, %v436
        %v438 = vld [vmem:[%s365 + $0x1] sm:$0xff]
        %440 = vrot.lane.b32.xlu0 %v438, 1
        %v441 = vpop.permute.xlu0 %440
        %v443 = vsel %vm266, 0.0, %v441
        %444 = vrot.lane.b32.xlu0 %v438, 127
        %v445 = vpop.permute.xlu0 %444
        %v447 = vsel %vm271, %v445, 0.0
        %s448 = sld [smem:[#allocation2 + $0xf]]
        %v449 = vstv %s448
        %v450 = vmul.f32 %v443, %v449
        %v451 = vadd.f32 %v433, %v450
        %s452 = sld [smem:[#allocation2 + $0x33]]
        %v453 = vstv %s452
        %v454 = vmul.f32 %v443, %v453
        %v455 = vadd.f32 %v437, %v454
        %s456 = sld [smem:[#allocation2 + $0x10]]
        %v457 = vstv %s456
        %v458 = vmul.f32 %v438, %v457
        %v459 = vadd.f32 %v451, %v458
        %s460 = sld [smem:[#allocation2 + $0x34]]
        %v461 = vstv %s460
        %v462 = vmul.f32 %v438, %v461
        %v463 = vadd.f32 %v455, %v462
        %s464 = sld [smem:[#allocation2 + $0x11]]
        %v465 = vstv %s464
        %v466 = vmul.f32 %v447, %v465
        %v467 = vadd.f32 %v459, %v466
        %s468 = sld [smem:[#allocation2 + $0x35]]
        %v469 = vstv %s468
        %v470 = vmul.f32 %v447, %v469
        %v471 = vadd.f32 %v463, %v470
        %s472 = scalar_lea.vmem %s217, 32 [#allocation7]
        %v473 = vld [vmem:[%s472] sm:$0x7f]
        %v475 = vrot.slane %v473, 7
        %v477 = vsel %vm260, 0.0, %v475
        %479 = vrot.lane.b32.xlu0 %v477, 1
        %v480 = vpop.permute.xlu0 %479
        %v482 = vsel %vm266, 0.0, %v480
        %483 = vrot.lane.b32.xlu0 %v477, 127
        %v484 = vpop.permute.xlu0 %483
        %v486 = vsel %vm271, %v484, 0.0
        %s487 = sld [smem:[#allocation2 + $0x12]]
        %v488 = vstv %s487
        %v489 = vmul.f32 %v482, %v488
        %v490 = vadd.f32 %v467, %v489
        %s491 = sld [smem:[#allocation2 + $0x36]]
        %v492 = vstv %s491
        %v493 = vmul.f32 %v482, %v492
        %v494 = vadd.f32 %v471, %v493
        %s495 = sld [smem:[#allocation2 + $0x13]]
        %v496 = vstv %s495
        %v497 = vmul.f32 %v477, %v496
        %v498 = vadd.f32 %v490, %v497
        %s499 = sld [smem:[#allocation2 + $0x37]]
        %v500 = vstv %s499
        %v501 = vmul.f32 %v477, %v500
        %v502 = vadd.f32 %v494, %v501
        %s503 = sld [smem:[#allocation2 + $0x14]]
        %v504 = vstv %s503
        %v505 = vmul.f32 %v486, %v504
        %v506 = vadd.f32 %v498, %v505
        %s507 = sld [smem:[#allocation2 + $0x38]]
        %v508 = vstv %s507
        %v509 = vmul.f32 %v486, %v508
        %v510 = vadd.f32 %v502, %v509
        %v511 = vld [vmem:[%s472] sm:$0xff]
        %513 = vrot.lane.b32.xlu0 %v511, 1
        %v514 = vpop.permute.xlu0 %513
        %v516 = vsel %vm266, 0.0, %v514
        %517 = vrot.lane.b32.xlu0 %v511, 127
        %v518 = vpop.permute.xlu0 %517
        %v520 = vsel %vm271, %v518, 0.0
        %s521 = sld [smem:[#allocation2 + $0x15]]
        %v522 = vstv %s521
        %v523 = vmul.f32 %v516, %v522
        %v524 = vadd.f32 %v506, %v523
        %s525 = sld [smem:[#allocation2 + $0x39]]
        %v526 = vstv %s525
        %v527 = vmul.f32 %v516, %v526
        %v528 = vadd.f32 %v510, %v527
        %s529 = sld [smem:[#allocation2 + $0x16]]
        %v530 = vstv %s529
        %v531 = vmul.f32 %v511, %v530
        %v532 = vadd.f32 %v524, %v531
        %s533 = sld [smem:[#allocation2 + $0x3a]]
        %v534 = vstv %s533
        %v535 = vmul.f32 %v511, %v534
        %v536 = vadd.f32 %v528, %v535
        %s537 = sld [smem:[#allocation2 + $0x17]]
        %v538 = vstv %s537
        %v539 = vmul.f32 %v520, %v538
        %v540 = vadd.f32 %v532, %v539
        %s541 = sld [smem:[#allocation2 + $0x3b]]
        %v542 = vstv %s541
        %v543 = vmul.f32 %v520, %v542
        %v544 = vadd.f32 %v536, %v543
        %v545 = vld [vmem:[%s472 + $0x1] sm:$0xff]
        %547 = vrot.lane.b32.xlu0 %v545, 1
        %v548 = vpop.permute.xlu0 %547
        %v550 = vsel %vm266, 0.0, %v548
        %551 = vrot.lane.b32.xlu0 %v545, 127
        %v552 = vpop.permute.xlu0 %551
        %v554 = vsel %vm271, %v552, 0.0
        %s555 = sld [smem:[#allocation2 + $0x18]]
        %v556 = vstv %s555
        %v557 = vmul.f32 %v550, %v556
        %v558 = vadd.f32 %v540, %v557
        %s559 = sld [smem:[#allocation2 + $0x3c]]
        %v560 = vstv %s559
        %v561 = vmul.f32 %v550, %v560
        %v562 = vadd.f32 %v544, %v561
        %s563 = sld [smem:[#allocation2 + $0x19]]
        %v564 = vstv %s563
        %v565 = vmul.f32 %v545, %v564
        %v566 = vadd.f32 %v558, %v565
        %s567 = sld [smem:[#allocation2 + $0x3d]]
        %v568 = vstv %s567
        %v569 = vmul.f32 %v545, %v568
        %v570 = vadd.f32 %v562, %v569
        %s571 = sld [smem:[#allocation2 + $0x1a]]
        %v572 = vstv %s571
        %v573 = vmul.f32 %v554, %v572
        %v574 = vadd.f32 %v566, %v573
        %s575 = sld [smem:[#allocation2 + $0x3e]]
        %v576 = vstv %s575
        %v577 = vmul.f32 %v554, %v576
        %v578 = vadd.f32 %v570, %v577
        %s579 = scalar_lea.vmem %s217, 48 [#allocation7]
        %v580 = vld [vmem:[%s579] sm:$0x7f]
        %v582 = vrot.slane %v580, 7
        %v584 = vsel %vm260, 0.0, %v582
        %586 = vrot.lane.b32.xlu0 %v584, 1
        %v587 = vpop.permute.xlu0 %586
        %v589 = vsel %vm266, 0.0, %v587
        %590 = vrot.lane.b32.xlu0 %v584, 127
        %v591 = vpop.permute.xlu0 %590
        %v593 = vsel %vm271, %v591, 0.0
        %s594 = sld [smem:[#allocation2 + $0x1b]]
        %v595 = vstv %s594
        %v596 = vmul.f32 %v589, %v595
        %v597 = vadd.f32 %v574, %v596
        %s598 = sld [smem:[#allocation2 + $0x3f]]
        %v599 = vstv %s598
        %v600 = vmul.f32 %v589, %v599
        %v601 = vadd.f32 %v578, %v600
        %s602 = sld [smem:[#allocation2 + $0x1c]]
        %v603 = vstv %s602
        %v604 = vmul.f32 %v584, %v603
        %v605 = vadd.f32 %v597, %v604
        %s606 = sld [smem:[#allocation2 + $0x40]]
        %v607 = vstv %s606
        %v608 = vmul.f32 %v584, %v607
        %v609 = vadd.f32 %v601, %v608
        %s610 = sld [smem:[#allocation2 + $0x1d]]
        %v611 = vstv %s610
        %v612 = vmul.f32 %v593, %v611
        %v613 = vadd.f32 %v605, %v612
        %s614 = sld [smem:[#allocation2 + $0x41]]
        %v615 = vstv %s614
        %v616 = vmul.f32 %v593, %v615
        %v617 = vadd.f32 %v609, %v616
        %v618 = vld [vmem:[%s579] sm:$0xff]
        %620 = vrot.lane.b32.xlu0 %v618, 1
        %v621 = vpop.permute.xlu0 %620
        %v623 = vsel %vm266, 0.0, %v621
        %624 = vrot.lane.b32.xlu0 %v618, 127
        %v625 = vpop.permute.xlu0 %624
        %v627 = vsel %vm271, %v625, 0.0
        %s628 = sld [smem:[#allocation2 + $0x1e]]
        %v629 = vstv %s628
        %v630 = vmul.f32 %v623, %v629
        %v631 = vadd.f32 %v613, %v630
        %s632 = sld [smem:[#allocation2 + $0x42]]
        %v633 = vstv %s632
        %v634 = vmul.f32 %v623, %v633
        %v635 = vadd.f32 %v617, %v634
        %s636 = sld [smem:[#allocation2 + $0x1f]]
        %v637 = vstv %s636
        %v638 = vmul.f32 %v618, %v637
        %v639 = vadd.f32 %v631, %v638
        %s640 = sld [smem:[#allocation2 + $0x43]]
        %v641 = vstv %s640
        %v642 = vmul.f32 %v618, %v641
        %v643 = vadd.f32 %v635, %v642
        %s644 = sld [smem:[#allocation2 + $0x20]]
        %v645 = vstv %s644
        %v646 = vmul.f32 %v627, %v645
        %v647 = vadd.f32 %v639, %v646
        %s648 = sld [smem:[#allocation2 + $0x44]]
        %v649 = vstv %s648
        %v650 = vmul.f32 %v627, %v649
        %v651 = vadd.f32 %v643, %v650
        %v652 = vld [vmem:[%s579 + $0x1] sm:$0xff]
        %654 = vrot.lane.b32.xlu0 %v652, 1
        %v655 = vpop.permute.xlu0 %654
        %v657 = vsel %vm266, 0.0, %v655
        %658 = vrot.lane.b32.xlu0 %v652, 127
        %v659 = vpop.permute.xlu0 %658
        %v661 = vsel %vm271, %v659, 0.0
        %s662 = sld [smem:[#allocation2 + $0x21]]
        %v663 = vstv %s662
        %v664 = vmul.f32 %v657, %v663
        %v665 = vadd.f32 %v647, %v664
        %s666 = sld [smem:[#allocation2 + $0x45]]
        %v667 = vstv %s666
        %v668 = vmul.f32 %v657, %v667
        %v669 = vadd.f32 %v651, %v668
        %s670 = sld [smem:[#allocation2 + $0x22]]
        %v671 = vstv %s670
        %v672 = vmul.f32 %v652, %v671
        %v673 = vadd.f32 %v665, %v672
        %s674 = sld [smem:[#allocation2 + $0x46]]
        %v675 = vstv %s674
        %v676 = vmul.f32 %v652, %v675
        %v677 = vadd.f32 %v669, %v676
        %s678 = sld [smem:[#allocation2 + $0x23]]
        %v679 = vstv %s678
        %v680 = vmul.f32 %v661, %v679
        %v681 = vadd.f32 %v673, %v680
        %s682 = sld [smem:[#allocation2 + $0x47]]
        %v683 = vstv %s682
        %v684 = vmul.f32 %v661, %v683
        %v685 = vadd.f32 %v677, %v684
        %s686 = sld [smem:[#allocation5]]
        %v687 = vstv %s686
        %v688 = vadd.f32 %v681, %v687
        %vm689 = vcmask 130048
        %690 = vst.msk [vmem:[%s251] sm:$0xff] %vm689, %v688
        %v691 = vsel %vm689, %v681, 0.0
        %v692 = vrot.slane %v691, 4
        %v693 = vadd.f32 %v691, %v692
        %v694 = vrot.slane %v693, 2
        %v695 = vadd.f32 %v693, %v694
        %v696 = vrot.slane %v695, 1
        %v697 = vadd.f32 %v695, %v696
        %v698 = vadd.f32 %v697, 0.0
        %v699 = vmul.f32 %v681, %v681
        %v700 = vsel %vm689, %v699, 0.0
        %v701 = vrot.slane %v700, 4
        %v702 = vadd.f32 %v700, %v701
        %v703 = vrot.slane %v702, 2
        %v704 = vadd.f32 %v702, %v703
        %v705 = vrot.slane %v704, 1
        %v706 = vadd.f32 %v704, %v705
        %v707 = vadd.f32 %v706, 0.0
        %s708 = sld [smem:[#allocation5 + $0x1]]
        %v709 = vstv %s708
        %v710 = vadd.f32 %v685, %v709
        %s711 = scalar_lea.vmem %s251, 16
        %712 = vst.msk [vmem:[%s711] sm:$0xff] %vm689, %v710
        %v713 = vsel %vm689, %v685, 0.0
        %v714 = vrot.slane %v713, 4
        %v715 = vadd.f32 %v713, %v714
        %v716 = vrot.slane %v715, 2
        %v717 = vadd.f32 %v715, %v716
        %v718 = vrot.slane %v717, 1
        %v719 = vadd.f32 %v717, %v718
        %v720 = vadd.f32 %v719, 0.0
        %v721 = vmul.f32 %v685, %v685
        %v722 = vsel %vm689, %v721, 0.0
        %v723 = vrot.slane %v722, 4
        %v724 = vadd.f32 %v722, %v723
        %v725 = vrot.slane %v724, 2
        %v726 = vadd.f32 %v724, %v725
        %v727 = vrot.slane %v726, 1
        %v728 = vadd.f32 %v726, %v727
        %v729 = vadd.f32 %v728, 0.0
        %v730 = vld [vmem:[%s217 + $0x7] sm:$0xff]
        %732 = vrot.lane.b32.xlu0 %v730, 1
        %v733 = vpop.permute.xlu0 %732
        %v735 = vsel %vm266, 0.0, %v733
        %736 = vrot.lane.b32.xlu0 %v730, 127
        %v737 = vpop.permute.xlu0 %736
        %v739 = vsel %vm271, %v737, 0.0
        %s740 = sld [smem:[#allocation2]]
        %v741 = vstv %s740
        %v742 = vmul.f32 %v735, %v741
        %v743 = vadd.f32 %v742, 0.0
        %s744 = sld [smem:[#allocation2 + $0x24]]
        %v745 = vstv %s744
        %v746 = vmul.f32 %v735, %v745
        %v747 = vadd.f32 %v746, 0.0
        %s748 = sld [smem:[#allocation2 + $0x1]]
        %v749 = vstv %s748
        %v750 = vmul.f32 %v730, %v749
        %v751 = vadd.f32 %v743, %v750
        %s752 = sld [smem:[#allocation2 + $0x25]]
        %v753 = vstv %s752
        %v754 = vmul.f32 %v730, %v753
        %v755 = vadd.f32 %v747, %v754
        %s756 = sld [smem:[#allocation2 + $0x2]]
        %v757 = vstv %s756
        %v758 = vmul.f32 %v739, %v757
        %v759 = vadd.f32 %v751, %v758
        %s760 = sld [smem:[#allocation2 + $0x26]]
        %v761 = vstv %s760
        %v762 = vmul.f32 %v739, %v761
        %v763 = vadd.f32 %v755, %v762
        %v764 = vld [vmem:[%s217 + $0x8] sm:$0xff]
        %766 = vrot.lane.b32.xlu0 %v764, 1
        %v767 = vpop.permute.xlu0 %766
        %v769 = vsel %vm266, 0.0, %v767
        %770 = vrot.lane.b32.xlu0 %v764, 127
        %v771 = vpop.permute.xlu0 %770
        %v773 = vsel %vm271, %v771, 0.0
        %s774 = sld [smem:[#allocation2 + $0x3]]
        %v775 = vstv %s774
        %v776 = vmul.f32 %v769, %v775
        %v777 = vadd.f32 %v759, %v776
        %s778 = sld [smem:[#allocation2 + $0x27]]
        %v779 = vstv %s778
        %v780 = vmul.f32 %v769, %v779
        %v781 = vadd.f32 %v763, %v780
        %s782 = sld [smem:[#allocation2 + $0x4]]
        %v783 = vstv %s782
        %v784 = vmul.f32 %v764, %v783
        %v785 = vadd.f32 %v777, %v784
        %s786 = sld [smem:[#allocation2 + $0x28]]
        %v787 = vstv %s786
        %v788 = vmul.f32 %v764, %v787
        %v789 = vadd.f32 %v781, %v788
        %s790 = sld [smem:[#allocation2 + $0x5]]
        %v791 = vstv %s790
        %v792 = vmul.f32 %v773, %v791
        %v793 = vadd.f32 %v785, %v792
        %s794 = sld [smem:[#allocation2 + $0x29]]
        %v795 = vstv %s794
        %v796 = vmul.f32 %v773, %v795
        %v797 = vadd.f32 %v789, %v796
        %v798 = vld [vmem:[%s217 + $0x9] sm:$0x7f]
        %vm799 = vcmask 1046528
        %v800 = vsel %vm799, %v798, 0.0
        %802 = vrot.lane.b32.xlu0 %v800, 1
        %v803 = vpop.permute.xlu0 %802
        %v805 = vsel %vm266, 0.0, %v803
        %806 = vrot.lane.b32.xlu0 %v800, 127
        %v807 = vpop.permute.xlu0 %806
        %v809 = vsel %vm271, %v807, 0.0
        %s810 = sld [smem:[#allocation2 + $0x6]]
        %v811 = vstv %s810
        %v812 = vmul.f32 %v805, %v811
        %v813 = vadd.f32 %v793, %v812
        %s814 = sld [smem:[#allocation2 + $0x2a]]
        %v815 = vstv %s814
        %v816 = vmul.f32 %v805, %v815
        %v817 = vadd.f32 %v797, %v816
        %s818 = sld [smem:[#allocation2 + $0x7]]
        %v819 = vstv %s818
        %v820 = vmul.f32 %v800, %v819
        %v821 = vadd.f32 %v813, %v820
        %s822 = sld [smem:[#allocation2 + $0x2b]]
        %v823 = vstv %s822
        %v824 = vmul.f32 %v800, %v823
        %v825 = vadd.f32 %v817, %v824
        %s826 = sld [smem:[#allocation2 + $0x8]]
        %v827 = vstv %s826
        %v828 = vmul.f32 %v809, %v827
        %v829 = vadd.f32 %v821, %v828
        %s830 = sld [smem:[#allocation2 + $0x2c]]
        %v831 = vstv %s830
        %v832 = vmul.f32 %v809, %v831
        %v833 = vadd.f32 %v825, %v832
        %v834 = vld [vmem:[%s365 + $0x7] sm:$0xff]
        %836 = vrot.lane.b32.xlu0 %v834, 1
        %v837 = vpop.permute.xlu0 %836
        %v839 = vsel %vm266, 0.0, %v837
        %840 = vrot.lane.b32.xlu0 %v834, 127
        %v841 = vpop.permute.xlu0 %840
        %v843 = vsel %vm271, %v841, 0.0
        %s844 = sld [smem:[#allocation2 + $0x9]]
        %v845 = vstv %s844
        %v846 = vmul.f32 %v839, %v845
        %v847 = vadd.f32 %v829, %v846
        %s848 = sld [smem:[#allocation2 + $0x2d]]
        %v849 = vstv %s848
        %v850 = vmul.f32 %v839, %v849
        %v851 = vadd.f32 %v833, %v850
        %s852 = sld [smem:[#allocation2 + $0xa]]
        %v853 = vstv %s852
        %v854 = vmul.f32 %v834, %v853
        %v855 = vadd.f32 %v847, %v854
        %s856 = sld [smem:[#allocation2 + $0x2e]]
        %v857 = vstv %s856
        %v858 = vmul.f32 %v834, %v857
        %v859 = vadd.f32 %v851, %v858
        %s860 = sld [smem:[#allocation2 + $0xb]]
        %v861 = vstv %s860
        %v862 = vmul.f32 %v843, %v861
        %v863 = vadd.f32 %v855, %v862
        %s864 = sld [smem:[#allocation2 + $0x2f]]
        %v865 = vstv %s864
        %v866 = vmul.f32 %v843, %v865
        %v867 = vadd.f32 %v859, %v866
        %v868 = vld [vmem:[%s365 + $0x8] sm:$0xff]
        %870 = vrot.lane.b32.xlu0 %v868, 1
        %v871 = vpop.permute.xlu0 %870
        %v873 = vsel %vm266, 0.0, %v871
        %874 = vrot.lane.b32.xlu0 %v868, 127
        %v875 = vpop.permute.xlu0 %874
        %v877 = vsel %vm271, %v875, 0.0
        %s878 = sld [smem:[#allocation2 + $0xc]]
        %v879 = vstv %s878
        %v880 = vmul.f32 %v873, %v879
        %v881 = vadd.f32 %v863, %v880
        %s882 = sld [smem:[#allocation2 + $0x30]]
        %v883 = vstv %s882
        %v884 = vmul.f32 %v873, %v883
        %v885 = vadd.f32 %v867, %v884
        %s886 = sld [smem:[#allocation2 + $0xd]]
        %v887 = vstv %s886
        %v888 = vmul.f32 %v868, %v887
        %v889 = vadd.f32 %v881, %v888
        %s890 = sld [smem:[#allocation2 + $0x31]]
        %v891 = vstv %s890
        %v892 = vmul.f32 %v868, %v891
        %v893 = vadd.f32 %v885, %v892
        %s894 = sld [smem:[#allocation2 + $0xe]]
        %v895 = vstv %s894
        %v896 = vmul.f32 %v877, %v895
        %v897 = vadd.f32 %v889, %v896
        %s898 = sld [smem:[#allocation2 + $0x32]]
        %v899 = vstv %s898
        %v900 = vmul.f32 %v877, %v899
        %v901 = vadd.f32 %v893, %v900
        %v902 = vld [vmem:[%s365 + $0x9] sm:$0x7f]
        %v903 = vsel %vm799, %v902, 0.0
        %905 = vrot.lane.b32.xlu0 %v903, 1
        %v906 = vpop.permute.xlu0 %905
        %v908 = vsel %vm266, 0.0, %v906
        %909 = vrot.lane.b32.xlu0 %v903, 127
        %v910 = vpop.permute.xlu0 %909
        %v912 = vsel %vm271, %v910, 0.0
        %s913 = sld [smem:[#allocation2 + $0xf]]
        %v914 = vstv %s913
        %v915 = vmul.f32 %v908, %v914
        %v916 = vadd.f32 %v897, %v915
        %s917 = sld [smem:[#allocation2 + $0x33]]
        %v918 = vstv %s917
        %v919 = vmul.f32 %v908, %v918
        %v920 = vadd.f32 %v901, %v919
        %s921 = sld [smem:[#allocation2 + $0x10]]
        %v922 = vstv %s921
        %v923 = vmul.f32 %v903, %v922
        %v924 = vadd.f32 %v916, %v923
        %s925 = sld [smem:[#allocation2 + $0x34]]
        %v926 = vstv %s925
        %v927 = vmul.f32 %v903, %v926
        %v928 = vadd.f32 %v920, %v927
        %s929 = sld [smem:[#allocation2 + $0x11]]
        %v930 = vstv %s929
        %v931 = vmul.f32 %v912, %v930
        %v932 = vadd.f32 %v924, %v931
        %s933 = sld [smem:[#allocation2 + $0x35]]
        %v934 = vstv %s933
        %v935 = vmul.f32 %v912, %v934
        %v936 = vadd.f32 %v928, %v935
        %v937 = vld [vmem:[%s472 + $0x7] sm:$0xff]
        %939 = vrot.lane.b32.xlu0 %v937, 1
        %v940 = vpop.permute.xlu0 %939
        %v942 = vsel %vm266, 0.0, %v940
        %943 = vrot.lane.b32.xlu0 %v937, 127
        %v944 = vpop.permute.xlu0 %943
        %v946 = vsel %vm271, %v944, 0.0
        %s947 = sld [smem:[#allocation2 + $0x12]]
        %v948 = vstv %s947
        %v949 = vmul.f32 %v942, %v948
        %v950 = vadd.f32 %v932, %v949
        %s951 = sld [smem:[#allocation2 + $0x36]]
        %v952 = vstv %s951
        %v953 = vmul.f32 %v942, %v952
        %v954 = vadd.f32 %v936, %v953
        %s955 = sld [smem:[#allocation2 + $0x13]]
        %v956 = vstv %s955
        %v957 = vmul.f32 %v937, %v956
        %v958 = vadd.f32 %v950, %v957
        %s959 = sld [smem:[#allocation2 + $0x37]]
        %v960 = vstv %s959
        %v961 = vmul.f32 %v937, %v960
        %v962 = vadd.f32 %v954, %v961
        %s963 = sld [smem:[#allocation2 + $0x14]]
        %v964 = vstv %s963
        %v965 = vmul.f32 %v946, %v964
        %v966 = vadd.f32 %v958, %v965
        %s967 = sld [smem:[#allocation2 + $0x38]]
        %v968 = vstv %s967
        %v969 = vmul.f32 %v946, %v968
        %v970 = vadd.f32 %v962, %v969
        %v971 = vld [vmem:[%s472 + $0x8] sm:$0xff]
        %973 = vrot.lane.b32.xlu0 %v971, 1
        %v974 = vpop.permute.xlu0 %973
        %v976 = vsel %vm266, 0.0, %v974
        %977 = vrot.lane.b32.xlu0 %v971, 127
        %v978 = vpop.permute.xlu0 %977
        %v980 = vsel %vm271, %v978, 0.0
        %s981 = sld [smem:[#allocation2 + $0x15]]
        %v982 = vstv %s981
        %v983 = vmul.f32 %v976, %v982
        %v984 = vadd.f32 %v966, %v983
        %s985 = sld [smem:[#allocation2 + $0x39]]
        %v986 = vstv %s985
        %v987 = vmul.f32 %v976, %v986
        %v988 = vadd.f32 %v970, %v987
        %s989 = sld [smem:[#allocation2 + $0x16]]
        %v990 = vstv %s989
        %v991 = vmul.f32 %v971, %v990
        %v992 = vadd.f32 %v984, %v991
        %s993 = sld [smem:[#allocation2 + $0x3a]]
        %v994 = vstv %s993
        %v995 = vmul.f32 %v971, %v994
        %v996 = vadd.f32 %v988, %v995
        %s997 = sld [smem:[#allocation2 + $0x17]]
        %v998 = vstv %s997
        %v999 = vmul.f32 %v980, %v998
        %v1000 = vadd.f32 %v992, %v999
        %s1001 = sld [smem:[#allocation2 + $0x3b]]
        %v1002 = vstv %s1001
        %v1003 = vmul.f32 %v980, %v1002
        %v1004 = vadd.f32 %v996, %v1003
        %v1005 = vld [vmem:[%s472 + $0x9] sm:$0x7f]
        %v1006 = vsel %vm799, %v1005, 0.0
        %1008 = vrot.lane.b32.xlu0 %v1006, 1
        %v1009 = vpop.permute.xlu0 %1008
        %v1011 = vsel %vm266, 0.0, %v1009
        %1012 = vrot.lane.b32.xlu0 %v1006, 127
        %v1013 = vpop.permute.xlu0 %1012
        %v1015 = vsel %vm271, %v1013, 0.0
        %s1016 = sld [smem:[#allocation2 + $0x18]]
        %v1017 = vstv %s1016
        %v1018 = vmul.f32 %v1011, %v1017
        %v1019 = vadd.f32 %v1000, %v1018
        %s1020 = sld [smem:[#allocation2 + $0x3c]]
        %v1021 = vstv %s1020
        %v1022 = vmul.f32 %v1011, %v1021
        %v1023 = vadd.f32 %v1004, %v1022
        %s1024 = sld [smem:[#allocation2 + $0x19]]
        %v1025 = vstv %s1024
        %v1026 = vmul.f32 %v1006, %v1025
        %v1027 = vadd.f32 %v1019, %v1026
        %s1028 = sld [smem:[#allocation2 + $0x3d]]
        %v1029 = vstv %s1028
        %v1030 = vmul.f32 %v1006, %v1029
        %v1031 = vadd.f32 %v1023, %v1030
        %s1032 = sld [smem:[#allocation2 + $0x1a]]
        %v1033 = vstv %s1032
        %v1034 = vmul.f32 %v1015, %v1033
        %v1035 = vadd.f32 %v1027, %v1034
        %s1036 = sld [smem:[#allocation2 + $0x3e]]
        %v1037 = vstv %s1036
        %v1038 = vmul.f32 %v1015, %v1037
        %v1039 = vadd.f32 %v1031, %v1038
        %v1040 = vld [vmem:[%s579 + $0x7] sm:$0xff]
        %1042 = vrot.lane.b32.xlu0 %v1040, 1
        %v1043 = vpop.permute.xlu0 %1042
        %v1045 = vsel %vm266, 0.0, %v1043
        %1046 = vrot.lane.b32.xlu0 %v1040, 127
        %v1047 = vpop.permute.xlu0 %1046
        %v1049 = vsel %vm271, %v1047, 0.0
        %s1050 = sld [smem:[#allocation2 + $0x1b]]
        %v1051 = vstv %s1050
        %v1052 = vmul.f32 %v1045, %v1051
        %v1053 = vadd.f32 %v1035, %v1052
        %s1054 = sld [smem:[#allocation2 + $0x3f]]
        %v1055 = vstv %s1054
        %v1056 = vmul.f32 %v1045, %v1055
        %v1057 = vadd.f32 %v1039, %v1056
        %s1058 = sld [smem:[#allocation2 + $0x1c]]
        %v1059 = vstv %s1058
        %v1060 = vmul.f32 %v1040, %v1059
        %v1061 = vadd.f32 %v1053, %v1060
        %s1062 = sld [smem:[#allocation2 + $0x40]]
        %v1063 = vstv %s1062
        %v1064 = vmul.f32 %v1040, %v1063
        %v1065 = vadd.f32 %v1057, %v1064
        %s1066 = sld [smem:[#allocation2 + $0x1d]]
        %v1067 = vstv %s1066
        %v1068 = vmul.f32 %v1049, %v1067
        %v1069 = vadd.f32 %v1061, %v1068
        %s1070 = sld [smem:[#allocation2 + $0x41]]
        %v1071 = vstv %s1070
        %v1072 = vmul.f32 %v1049, %v1071
        %v1073 = vadd.f32 %v1065, %v1072
        %v1074 = vld [vmem:[%s579 + $0x8] sm:$0xff]
        %1076 = vrot.lane.b32.xlu0 %v1074, 1
        %v1077 = vpop.permute.xlu0 %1076
        %v1079 = vsel %vm266, 0.0, %v1077
        %1080 = vrot.lane.b32.xlu0 %v1074, 127
        %v1081 = vpop.permute.xlu0 %1080
        %v1083 = vsel %vm271, %v1081, 0.0
        %s1084 = sld [smem:[#allocation2 + $0x1e]]
        %v1085 = vstv %s1084
        %v1086 = vmul.f32 %v1079, %v1085
        %v1087 = vadd.f32 %v1069, %v1086
        %s1088 = sld [smem:[#allocation2 + $0x42]]
        %v1089 = vstv %s1088
        %v1090 = vmul.f32 %v1079, %v1089
        %v1091 = vadd.f32 %v1073, %v1090
        %s1092 = sld [smem:[#allocation2 + $0x1f]]
        %v1093 = vstv %s1092
        %v1094 = vmul.f32 %v1074, %v1093
        %v1095 = vadd.f32 %v1087, %v1094
        %s1096 = sld [smem:[#allocation2 + $0x43]]
        %v1097 = vstv %s1096
        %v1098 = vmul.f32 %v1074, %v1097
        %v1099 = vadd.f32 %v1091, %v1098
        %s1100 = sld [smem:[#allocation2 + $0x20]]
        %v1101 = vstv %s1100
        %v1102 = vmul.f32 %v1083, %v1101
        %v1103 = vadd.f32 %v1095, %v1102
        %s1104 = sld [smem:[#allocation2 + $0x44]]
        %v1105 = vstv %s1104
        %v1106 = vmul.f32 %v1083, %v1105
        %v1107 = vadd.f32 %v1099, %v1106
        %v1108 = vld [vmem:[%s579 + $0x9] sm:$0x7f]
        %v1109 = vsel %vm799, %v1108, 0.0
        %1111 = vrot.lane.b32.xlu0 %v1109, 1
        %v1112 = vpop.permute.xlu0 %1111
        %v1114 = vsel %vm266, 0.0, %v1112
        %1115 = vrot.lane.b32.xlu0 %v1109, 127
        %v1116 = vpop.permute.xlu0 %1115
        %v1118 = vsel %vm271, %v1116, 0.0
        %s1119 = sld [smem:[#allocation2 + $0x21]]
        %v1120 = vstv %s1119
        %v1121 = vmul.f32 %v1114, %v1120
        %v1122 = vadd.f32 %v1103, %v1121
        %s1123 = sld [smem:[#allocation2 + $0x45]]
        %v1124 = vstv %s1123
        %v1125 = vmul.f32 %v1114, %v1124
        %v1126 = vadd.f32 %v1107, %v1125
        %s1127 = sld [smem:[#allocation2 + $0x22]]
        %v1128 = vstv %s1127
        %v1129 = vmul.f32 %v1109, %v1128
        %v1130 = vadd.f32 %v1122, %v1129
        %s1131 = sld [smem:[#allocation2 + $0x46]]
        %v1132 = vstv %s1131
        %v1133 = vmul.f32 %v1109, %v1132
        %v1134 = vadd.f32 %v1126, %v1133
        %s1135 = sld [smem:[#allocation2 + $0x23]]
        %v1136 = vstv %s1135
        %v1137 = vmul.f32 %v1118, %v1136
        %v1138 = vadd.f32 %v1130, %v1137
        %s1139 = sld [smem:[#allocation2 + $0x47]]
        %v1140 = vstv %s1139
        %v1141 = vmul.f32 %v1118, %v1140
        %v1142 = vadd.f32 %v1134, %v1141
        %s1143 = sld [smem:[#allocation5]]
        %v1144 = vstv %s1143
        %v1145 = vadd.f32 %v1138, %v1144
        %1146 = vst.msk [vmem:[%s251 + $0x8] sm:$0xff] %vm689, %v1145
        %v1147 = vsel %vm689, %v1138, 0.0
        %v1148 = vrot.slane %v1147, 4
        %v1149 = vadd.f32 %v1147, %v1148
        %v1150 = vrot.slane %v1149, 2
        %v1151 = vadd.f32 %v1149, %v1150
        %v1152 = vrot.slane %v1151, 1
        %v1153 = vadd.f32 %v1151, %v1152
        %v1154 = vadd.f32 %v698, %v1153
        %v1155 = vmul.f32 %v1138, %v1138
        %v1156 = vsel %vm689, %v1155, 0.0
        %v1157 = vrot.slane %v1156, 4
        %v1158 = vadd.f32 %v1156, %v1157
        %v1159 = vrot.slane %v1158, 2
        %v1160 = vadd.f32 %v1158, %v1159
        %v1161 = vrot.slane %v1160, 1
        %v1162 = vadd.f32 %v1160, %v1161
        %v1163 = vadd.f32 %v707, %v1162
        %s1164 = sld [smem:[#allocation5 + $0x1]]
        %v1165 = vstv %s1164
        %v1166 = vadd.f32 %v1142, %v1165
        %1167 = vst.msk [vmem:[%s711 + $0x8] sm:$0xff] %vm689, %v1166
        %v1168 = vsel %vm689, %v1142, 0.0
        %v1169 = vrot.slane %v1168, 4
        %v1170 = vadd.f32 %v1168, %v1169
        %v1171 = vrot.slane %v1170, 2
        %v1172 = vadd.f32 %v1170, %v1171
        %v1173 = vrot.slane %v1172, 1
        %v1174 = vadd.f32 %v1172, %v1173
        %v1175 = vadd.f32 %v720, %v1174
        %v1176 = vmul.f32 %v1142, %v1142
        %v1177 = vsel %vm689, %v1176, 0.0
        %v1178 = vrot.slane %v1177, 4
        %v1179 = vadd.f32 %v1177, %v1178
        %v1180 = vrot.slane %v1179, 2
        %v1181 = vadd.f32 %v1179, %v1180
        %v1182 = vrot.slane %v1181, 1
        %v1183 = vadd.f32 %v1181, %v1182
        %v1184 = vadd.f32 %v729, %v1183
        %vm1185 = vcmask 122880
        %1186 = vst.msk [vmem:[%s255] sm:$0x1] %vm1185, %v1154
        %1187 = vst.msk [vmem:[%s255 + $0x2] sm:$0x1] %vm1185, %v1163
        %1188 = vst.msk [vmem:[%s255 + $0x1] sm:$0x1] %vm1185, %v1175
        %1189 = vst.msk [vmem:[%s255 + $0x3] sm:$0x1] %vm1185, %v1184
        %p1190 = scmp.lt.s32.totalorder %s21, 1
        %s1191 = scalar_select %p1190, %s21, 1
        %s1192 = smul.addr %s1191, 4
        %s1193 = smul.addr %s1192, 8
        %s1194 = scalar_lea.vmem %s3, %s1193
        %p1195 = scmp.lt.s32.totalorder %s21, 1
        %s1196 = scalar_select %p1195, %s21, 1
        %s1197 = smul.addr %s1196, 4
        %s1198 = scalar_lea.vmem %s4, %s1197
        // Predicated region
        $region45: #{get_disp_forward.1} parent=31 // pred_check
          %p1199 = pneg %p107
        $region46: #{get_disp_forward.1} parent=31 // pred_check_branch
          %1201 = sbr.rel (%p1199) target = $region48
        $region47: #{get_disp_forward.1} parent=31 // pred_region
          _
        $region48: #{get_disp_forward.1} parent=31 // pred_fallthru
          _
        // Predicated region
        $region49: #{get_disp_forward.1} parent=31 // pred_check
          %p1202 = pneg %p133
        $region50: #{get_disp_forward.1} parent=31 // pred_check_branch
          %1204 = sbr.rel (%p1202) target = $region52
        $region51: #{get_disp_forward.1} parent=31 // pred_region
          _
        $region52: #{get_disp_forward.1} parent=31 // pred_fallthru
          _
      $region32: #{get_disp_forward.1} parent=5 // pred_fallthru
        _
      %p1205 = scmp.le.s32.totalorder 2, %s16
      // Predicated region
      $region53: #{get_disp_forward.1} parent=5 // pred_check
        %p1206 = pneg %p1205
      $region54: #{get_disp_forward.1} parent=5 // pred_check_branch
        %1208 = sbr.rel (%p1206) target = $region56
      $region55: #{get_disp_forward.1} parent=5 // pred_region
        %s1209 = ssub.s32 %s16, 2
        // Predicated region
        $region57: #{get_disp_forward.1} parent=55 // pred_check
          %p1210 = pneg %p113
        $region58: #{get_disp_forward.1} parent=55 // pred_check_branch
          %1212 = sbr.rel (%p1210) target = $region60
        $region59: #{get_disp_forward.1} parent=55 // pred_region
          %p1213 = scmp.lt.s32.totalorder %s22, 1
          %s1214 = scalar_select %p1213, %s22, 1
          %s1215 = smul.addr %s1214, 4
          %s1216 = smul.addr %s1215, 8
          %s1217 = scalar_lea.vmem %s3, %s1216
        $region60: #{get_disp_forward.1} parent=55 // pred_fallthru
          _
        // Predicated region
        $region61: #{get_disp_forward.1} parent=55 // pred_check
          %p1218 = pneg %p139
        $region62: #{get_disp_forward.1} parent=55 // pred_check_branch
          %1220 = sbr.rel (%p1218) target = $region64
        $region63: #{get_disp_forward.1} parent=55 // pred_region
          %p1221 = scmp.lt.s32.totalorder %s22, 1
          %s1222 = scalar_select %p1221, %s22, 1
          %s1223 = smul.addr %s1222, 4
          %s1224 = scalar_lea.vmem %s4, %s1223
        $region64: #{get_disp_forward.1} parent=55 // pred_fallthru
          _
      $region56: #{get_disp_forward.1} parent=5 // pred_fallthru
        _
    $region6: #{get_disp_forward.1} parent=1 // loop_footer
      %s20 = sadd.s32 1, %s16
    $region7: #{get_disp_forward.1} parent=1 // loop_footer_branch
      %15 = sbr.rel target = $region3
    $region8: #{get_disp_forward.1} parent=1 // loop_exit
      _
    %1225 = vsyncpa [#allocation3], 1
    %s1226 = scalar_lea.sflag [#allocation3], 1
    %1227 = vsyncpa %s1226, 1
    %1228 = vsyncpa [#allocation4], 1
    %s1229 = scalar_lea.sflag [#allocation4], 1
    %1230 = vsyncpa %s1229, 1
    %1231 = vsyncpa [#allocation6], 1

</llo_original>
